<compile_context>
chip_gen: v7x
topology: tpu7x:2x2x1
jax: 0.10.0
libtpu: 0.0.40
codegen_flags: <defaults>
</compile_context>

<pallas_src>
import math

import jax
import jax.numpy as jnp
from jax import lax
from jax.experimental import pallas as pl
from jax.experimental.pallas import tpu as pltpu


def _make_mha_kernel(T, C, H, out_dtype):
    """Fused MHA kernel for one batch element: QKV proj + SDPA + out proj."""
    D = C // H
    scale = 1.0 / math.sqrt(D)

    def kernel(x_ref, wqkv_ref, bqkv_ref, wproj_ref, bproj_ref, o_ref):
        # x_ref    : (1, T, C)   bf16   input tokens for this batch element
        # wqkv_ref : (C, 3C)     bf16   c_attn weight (already transposed)
        # bqkv_ref : (1, 3C)     f32    c_attn bias
        # wproj_ref: (C, C)      bf16   c_proj weight (already transposed)
        # bproj_ref: (1, C)      f32    c_proj bias
        # o_ref    : (1, T, C)   f32    output tokens
        x = x_ref[0]  # (T, C) bf16

        # --- QKV projection: single (T,C) @ (C,3C) matmul, f32 accumulate ---
        qkv = jnp.dot(x, wqkv_ref[...], preferred_element_type=jnp.float32)
        qkv = qkv + bqkv_ref[...]            # (1, 3C) broadcasts; f32 epilogue

        # Lane-aligned (multiple-of-128) splits -> no relayout.
        # Fold the 1/sqrt(D) scale into q once (T*C ops) instead of scaling
        # each (T, T) score matrix per head (H*T*T ops).
        q = (qkv[:, 0:C] * scale).astype(jnp.bfloat16)   # (T, C)
        k = qkv[:, C:2 * C].astype(jnp.bfloat16)         # (T, C)
        v = qkv[:, 2 * C:3 * C].astype(jnp.bfloat16)     # (T, C)

        # --- per-head scaled dot-product attention (mask=None, no dropout) ---
        head_outs = []
        for h in range(H):                   # static unroll over heads (H=4)
            sl = slice(h * D, (h + 1) * D)
            q_h = q[:, sl]                   # (T, D) bf16 (scale pre-applied)
            k_h = k[:, sl]                   # (T, D) bf16
            v_h = v[:, sl]                   # (T, D) bf16

            # scores = q_h @ k_h^T  (contract on D; no materialized transpose)
            s = lax.dot_general(
                q_h, k_h,
                dimension_numbers=(((1,), (1,)), ((), ())),
                preferred_element_type=jnp.float32,
            )                                              # (T, T) f32

            # numerically-stable softmax, all in f32
            m = jnp.max(s, axis=-1, keepdims=True)
            p = jnp.exp(s - m)
            p = p * pl.reciprocal(jnp.sum(p, axis=-1, keepdims=True))

            y_h = jnp.dot(p.astype(jnp.bfloat16), v_h,
                          preferred_element_type=jnp.float32)  # (T, D) f32
            head_outs.append(y_h)

        # concat heads back to (T, C) and do ONE K=C output projection
        y = jnp.concatenate(head_outs, axis=-1)            # (T, C) f32
        out = jnp.dot(y.astype(jnp.bfloat16), wproj_ref[...],
                      preferred_element_type=jnp.float32)
        out = out + bproj_ref[...]                          # (1, C) broadcasts

        o_ref[0] = out.astype(out_dtype)     # lane-dense (C=128) store

    return kernel


def mha_forward(x, params, n_head):
    """MultiHeadAttention forward (eval mode, mask=None) via one Pallas kernel.

    x      : (B, T, C) f32
    params : (w_qkv (3C, C), b_qkv (3C,), w_proj (C, C), b_proj (C,))
             in PyTorch nn.Linear (out_features, in_features) convention.
    """
    # TODO(synk): optional attn_mask is not plumbed into the kernel (mask=None path only).
    # TODO(synk): training-mode dropout (attn_dropout / resid_dropout / sdpa dropout_p)
    #             is identity at inference and not implemented.
    w_qkv, b_qkv, w_proj, b_proj = params
    B, T, C = x.shape
    assert C % n_head == 0
    assert T % 8 == 0 and C % 128 == 0, "lane/sublane-aligned shapes expected"

    # Flat, lane-dense 2-D weights; bf16 operands for the MXU (f32 accumulate
    # happens inside the kernel).  Biases stay f32 for the f32 epilogue.
    w_qkv_t = jnp.asarray(w_qkv).T.astype(jnp.bfloat16)    # (C, 3C)
    w_proj_t = jnp.asarray(w_proj).T.astype(jnp.bfloat16)  # (C, C)
    b_qkv2 = jnp.asarray(b_qkv).reshape(1, 3 * C).astype(jnp.float32)
    b_proj2 = jnp.asarray(b_proj).reshape(1, C).astype(jnp.float32)
    x_bf = x.astype(jnp.bfloat16)

    kernel = _make_mha_kernel(T, C, n_head, x.dtype)

    out = pl.pallas_call(
        kernel,
        out_shape=jax.ShapeDtypeStruct((B, T, C), x.dtype),
        grid_spec=pltpu.PrefetchScalarGridSpec(
            num_scalar_prefetch=0,
            grid=(B,),  # B>=2 + "parallel" lets v7x's two TCs each take a batch
            in_specs=[
                pl.BlockSpec((1, T, C), lambda b: (b, 0, 0)),        # x
                pl.BlockSpec((C, 3 * C), lambda b: (0, 0)),          # w_qkv
                pl.BlockSpec((1, 3 * C), lambda b: (0, 0)),          # b_qkv
                pl.BlockSpec((C, C), lambda b: (0, 0)),              # w_proj
                pl.BlockSpec((1, C), lambda b: (0, 0)),              # b_proj
            ],
            out_specs=pl.BlockSpec((1, T, C), lambda b: (b, 0, 0)),
        ),
        compiler_params=pltpu.CompilerParams(
            dimension_semantics=("parallel",),
        ),
    )(x_bf, w_qkv_t, b_qkv2, w_proj_t, b_proj2)
    return out


def init_mha_params(key, n_embd, n_head):
    """nn.Linear-style init (uniform +-1/sqrt(fan_in)), PyTorch (out,in) layout."""
    del n_head
    C = n_embd
    k1, k2, k3, k4 = jax.random.split(key, 4)
    bound = 1.0 / math.sqrt(C)
    w_qkv = jax.random.uniform(k1, (3 * C, C), jnp.float32, -bound, bound)
    b_qkv = jax.random.uniform(k2, (3 * C,), jnp.float32, -bound, bound)
    w_proj = jax.random.uniform(k3, (C, C), jnp.float32, -bound, bound)
    b_proj = jax.random.uniform(k4, (C,), jnp.float32, -bound, bound)
    return (w_qkv, b_qkv, w_proj, b_proj)


def mha_reference(x, params, n_head):
    """Pure-JAX reference with the same bf16-operand / f32-accumulate precision."""
    w_qkv, b_qkv, w_proj, b_proj = params
    B, T, C = x.shape
    D = C // n_head
    scale = 1.0 / math.sqrt(D)
    bf = jnp.bfloat16

    qkv = jnp.dot(x.astype(bf), w_qkv.T.astype(bf),
                  preferred_element_type=jnp.float32) + b_qkv.reshape(1, 1, 3 * C)
    q, k, v = qkv[..., :C], qkv[..., C:2 * C], qkv[..., 2 * C:]
    q = q.reshape(B, T, n_head, D).transpose(0, 2, 1, 3)  # (B,H,T,D)
    k = k.reshape(B, T, n_head, D).transpose(0, 2, 1, 3)
    v = v.reshape(B, T, n_head, D).transpose(0, 2, 1, 3)

    s = jnp.einsum("bhtd,bhsd->bhts", (q * scale).astype(bf), k.astype(bf),
                   preferred_element_type=jnp.float32)
    m = jnp.max(s, axis=-1, keepdims=True)
    p = jnp.exp(s - m)
    p = p / jnp.sum(p, axis=-1, keepdims=True)
    y = jnp.einsum("bhts,bhsd->bhtd", p.astype(bf), v.astype(bf),
                   preferred_element_type=jnp.float32)
    y = y.transpose(0, 2, 1, 3).reshape(B, T, C)
    out = jnp.dot(y.astype(bf), w_proj.T.astype(bf),
                  preferred_element_type=jnp.float32) + b_proj.reshape(1, 1, C)
    return out


if __name__ == "__main__":
    # Module config: MultiHeadAttention(n_embd=128, n_head=4, bias=True),
    # inference mode (dropout = identity), mask=None.
    # n_embd/T = 128 chosen so every block is lane-dense (128-wide last dim)
    # while staying small (x is 2*128*128 f32 = 128 KiB).
    B, T, n_embd, n_head = 2, 128, 128, 4

    key = jax.random.PRNGKey(0)
    kx, kp = jax.random.split(key)
    x = jax.random.normal(kx, (B, T, n_embd), jnp.float32)
    params = init_mha_params(kp, n_embd, n_head)

    out = mha_forward(x, params, n_head)
    out = jax.block_until_ready(out)

    ref = mha_reference(x, params, n_head)
    assert out.shape == ref.shape == (B, T, n_embd)
    assert jnp.allclose(out, ref, atol=2e-3, rtol=2e-3), "mismatch vs reference"

    print("KERNEL_OK")
</pallas_src>

<mosaic_0001>
module attributes {stable_mosaic.version = 11 : i64} {
  func.func @kernel(%arg0: i32, %arg1: memref<1x128x128xbf16, #tpu.memory_space<vmem>>, %arg2: memref<128x384xbf16, #tpu.memory_space<vmem>>, %arg3: memref<1x384xf32, #tpu.memory_space<vmem>>, %arg4: memref<128x128xbf16, #tpu.memory_space<vmem>>, %arg5: memref<1x128xf32, #tpu.memory_space<vmem>>, %arg6: memref<1x128x128xf32, #tpu.memory_space<vmem>>) attributes {dimension_semantics = [#tpu.dimension_semantics<parallel>], iteration_bounds = array<i64: 2>, scalar_prefetch = 0 : i64, scratch_operands = 0 : i64, tpu.core_type = #tpu.core_type<tc>, window_params = [{transform_indices = @transform_0, window_bounds = array<i64: 1, 128, 128>}, {pipeline_mode = #tpu.pipeline_mode<synchronous>, transform_indices = @transform_1, window_bounds = array<i64: 128, 384>}, {pipeline_mode = #tpu.pipeline_mode<synchronous>, transform_indices = @transform_2, window_bounds = array<i64: 1, 384>}, {pipeline_mode = #tpu.pipeline_mode<synchronous>, transform_indices = @transform_3, window_bounds = array<i64: 128, 128>}, {pipeline_mode = #tpu.pipeline_mode<synchronous>, transform_indices = @transform_4, window_bounds = array<i64: 1, 128>}, {transform_indices = @transform_5, window_bounds = array<i64: 1, 128, 128>}]} {
    %c0 = arith.constant 0 : index
    %c0_0 = arith.constant 0 : index
    %c0_1 = arith.constant 0 : index
    %0 = vector.load %arg1[%c0, %c0_0, %c0_1] : memref<1x128x128xbf16, #tpu.memory_space<vmem>>, vector<1x128x128xbf16>
    %1 = vector.shape_cast %0 : vector<1x128x128xbf16> to vector<128x128xbf16>
    %c0_2 = arith.constant 0 : index
    %c0_3 = arith.constant 0 : index
    %2 = vector.load %arg2[%c0_2, %c0_3] : memref<128x384xbf16, #tpu.memory_space<vmem>>, vector<128x384xbf16>
    %cst = arith.constant dense<0.000000e+00> : vector<128x384xf32>
    %3 = tpu.matmul %1, %2, %cst {dimension_numbers = #tpu.dot_dimension_numbers<[1], [0], [0], [1], [0, 0, 1, 1], [], []>} : vector<128x128xbf16>, vector<128x384xbf16>, vector<128x384xf32> -> vector<128x384xf32>
    %c0_4 = arith.constant 0 : index
    %c0_5 = arith.constant 0 : index
    %4 = vector.load %arg3[%c0_4, %c0_5] : memref<1x384xf32, #tpu.memory_space<vmem>>, vector<1x384xf32>
    %5 = vector.broadcast %4 : vector<1x384xf32> to vector<128x384xf32>
    %6 = arith.addf %3, %5 : vector<128x384xf32>
    %7 = vector.extract_strided_slice %6 {offsets = [0, 0], sizes = [128, 128], strides = [1, 1]} : vector<128x384xf32> to vector<128x128xf32>
    %cst_6 = arith.constant 0.176776692 : f32
    %8 = vector.broadcast %cst_6 : f32 to vector<128x128xf32>
    %9 = arith.mulf %7, %8 : vector<128x128xf32>
    %10 = arith.truncf %9 : vector<128x128xf32> to vector<128x128xbf16>
    %11 = vector.extract_strided_slice %6 {offsets = [0, 128], sizes = [128, 128], strides = [1, 1]} : vector<128x384xf32> to vector<128x128xf32>
    %12 = arith.truncf %11 : vector<128x128xf32> to vector<128x128xbf16>
    %13 = vector.extract_strided_slice %6 {offsets = [0, 256], sizes = [128, 128], strides = [1, 1]} : vector<128x384xf32> to vector<128x128xf32>
    %14 = arith.truncf %13 : vector<128x128xf32> to vector<128x128xbf16>
    %15 = vector.extract_strided_slice %10 {offsets = [0, 0], sizes = [128, 32], strides = [1, 1]} : vector<128x128xbf16> to vector<128x32xbf16>
    %16 = vector.extract_strided_slice %12 {offsets = [0, 0], sizes = [128, 32], strides = [1, 1]} : vector<128x128xbf16> to vector<128x32xbf16>
    %17 = vector.extract_strided_slice %14 {offsets = [0, 0], sizes = [128, 32], strides = [1, 1]} : vector<128x128xbf16> to vector<128x32xbf16>
    %cst_7 = arith.constant dense<0.000000e+00> : vector<128x128xf32>
    %18 = tpu.matmul %15, %16, %cst_7 {dimension_numbers = #tpu.dot_dimension_numbers<[1], [1], [0], [0], [0, 0, 1, 0], [], []>} : vector<128x32xbf16>, vector<128x32xbf16>, vector<128x128xf32> -> vector<128x128xf32>
    %cst_8 = arith.constant dense<0xFF800000> : vector<128xf32>
    %19 = vector.multi_reduction <maximumf>, %18, %cst_8 [1] : vector<128x128xf32> to vector<128xf32>
    %20 = vector.shape_cast %19 : vector<128xf32> to vector<128x1xf32>
    %21 = vector.broadcast %20 : vector<128x1xf32> to vector<128x128xf32>
    %22 = arith.subf %18, %21 : vector<128x128xf32>
    %23 = math.exp %22 : vector<128x128xf32>
    %cst_9 = arith.constant dense<0.000000e+00> : vector<128xf32>
    %24 = vector.multi_reduction <add>, %23, %cst_9 [1] : vector<128x128xf32> to vector<128xf32>
    %25 = vector.shape_cast %24 : vector<128xf32> to vector<128x1xf32>
    %26 = tpu.reciprocal %25 : vector<128x1xf32> -> vector<128x1xf32>
    %27 = vector.broadcast %26 : vector<128x1xf32> to vector<128x128xf32>
    %28 = arith.mulf %23, %27 : vector<128x128xf32>
    %29 = arith.truncf %28 : vector<128x128xf32> to vector<128x128xbf16>
    %cst_10 = arith.constant dense<0.000000e+00> : vector<128x32xf32>
    %30 = tpu.matmul %29, %17, %cst_10 {dimension_numbers = #tpu.dot_dimension_numbers<[1], [0], [0], [1], [0, 0, 1, 1], [], []>} : vector<128x128xbf16>, vector<128x32xbf16>, vector<128x32xf32> -> vector<128x32xf32>
    %31 = vector.extract_strided_slice %10 {offsets = [0, 32], sizes = [128, 32], strides = [1, 1]} : vector<128x128xbf16> to vector<128x32xbf16>
    %32 = vector.extract_strided_slice %12 {offsets = [0, 32], sizes = [128, 32], strides = [1, 1]} : vector<128x128xbf16> to vector<128x32xbf16>
    %33 = vector.extract_strided_slice %14 {offsets = [0, 32], sizes = [128, 32], strides = [1, 1]} : vector<128x128xbf16> to vector<128x32xbf16>
    %cst_11 = arith.constant dense<0.000000e+00> : vector<128x128xf32>
    %34 = tpu.matmul %31, %32, %cst_11 {dimension_numbers = #tpu.dot_dimension_numbers<[1], [1], [0], [0], [0, 0, 1, 0], [], []>} : vector<128x32xbf16>, vector<128x32xbf16>, vector<128x128xf32> -> vector<128x128xf32>
    %cst_12 = arith.constant dense<0xFF800000> : vector<128xf32>
    %35 = vector.multi_reduction <maximumf>, %34, %cst_12 [1] : vector<128x128xf32> to vector<128xf32>
    %36 = vector.shape_cast %35 : vector<128xf32> to vector<128x1xf32>
    %37 = vector.broadcast %36 : vector<128x1xf32> to vector<128x128xf32>
    %38 = arith.subf %34, %37 : vector<128x128xf32>
    %39 = math.exp %38 : vector<128x128xf32>
    %cst_13 = arith.constant dense<0.000000e+00> : vector<128xf32>
    %40 = vector.multi_reduction <add>, %39, %cst_13 [1] : vector<128x128xf32> to vector<128xf32>
    %41 = vector.shape_cast %40 : vector<128xf32> to vector<128x1xf32>
    %42 = tpu.reciprocal %41 : vector<128x1xf32> -> vector<128x1xf32>
    %43 = vector.broadcast %42 : vector<128x1xf32> to vector<128x128xf32>
    %44 = arith.mulf %39, %43 : vector<128x128xf32>
    %45 = arith.truncf %44 : vector<128x128xf32> to vector<128x128xbf16>
    %cst_14 = arith.constant dense<0.000000e+00> : vector<128x32xf32>
    %46 = tpu.matmul %45, %33, %cst_14 {dimension_numbers = #tpu.dot_dimension_numbers<[1], [0], [0], [1], [0, 0, 1, 1], [], []>} : vector<128x128xbf16>, vector<128x32xbf16>, vector<128x32xf32> -> vector<128x32xf32>
    %47 = vector.extract_strided_slice %10 {offsets = [0, 64], sizes = [128, 32], strides = [1, 1]} : vector<128x128xbf16> to vector<128x32xbf16>
    %48 = vector.extract_strided_slice %12 {offsets = [0, 64], sizes = [128, 32], strides = [1, 1]} : vector<128x128xbf16> to vector<128x32xbf16>
    %49 = vector.extract_strided_slice %14 {offsets = [0, 64], sizes = [128, 32], strides = [1, 1]} : vector<128x128xbf16> to vector<128x32xbf16>
    %cst_15 = arith.constant dense<0.000000e+00> : vector<128x128xf32>
    %50 = tpu.matmul %47, %48, %cst_15 {dimension_numbers = #tpu.dot_dimension_numbers<[1], [1], [0], [0], [0, 0, 1, 0], [], []>} : vector<128x32xbf16>, vector<128x32xbf16>, vector<128x128xf32> -> vector<128x128xf32>
    %cst_16 = arith.constant dense<0xFF800000> : vector<128xf32>
    %51 = vector.multi_reduction <maximumf>, %50, %cst_16 [1] : vector<128x128xf32> to vector<128xf32>
    %52 = vector.shape_cast %51 : vector<128xf32> to vector<128x1xf32>
    %53 = vector.broadcast %52 : vector<128x1xf32> to vector<128x128xf32>
    %54 = arith.subf %50, %53 : vector<128x128xf32>
    %55 = math.exp %54 : vector<128x128xf32>
    %cst_17 = arith.constant dense<0.000000e+00> : vector<128xf32>
    %56 = vector.multi_reduction <add>, %55, %cst_17 [1] : vector<128x128xf32> to vector<128xf32>
    %57 = vector.shape_cast %56 : vector<128xf32> to vector<128x1xf32>
    %58 = tpu.reciprocal %57 : vector<128x1xf32> -> vector<128x1xf32>
    %59 = vector.broadcast %58 : vector<128x1xf32> to vector<128x128xf32>
    %60 = arith.mulf %55, %59 : vector<128x128xf32>
    %61 = arith.truncf %60 : vector<128x128xf32> to vector<128x128xbf16>
    %cst_18 = arith.constant dense<0.000000e+00> : vector<128x32xf32>
    %62 = tpu.matmul %61, %49, %cst_18 {dimension_numbers = #tpu.dot_dimension_numbers<[1], [0], [0], [1], [0, 0, 1, 1], [], []>} : vector<128x128xbf16>, vector<128x32xbf16>, vector<128x32xf32> -> vector<128x32xf32>
    %63 = vector.extract_strided_slice %10 {offsets = [0, 96], sizes = [128, 32], strides = [1, 1]} : vector<128x128xbf16> to vector<128x32xbf16>
    %64 = vector.extract_strided_slice %12 {offsets = [0, 96], sizes = [128, 32], strides = [1, 1]} : vector<128x128xbf16> to vector<128x32xbf16>
    %65 = vector.extract_strided_slice %14 {offsets = [0, 96], sizes = [128, 32], strides = [1, 1]} : vector<128x128xbf16> to vector<128x32xbf16>
    %cst_19 = arith.constant dense<0.000000e+00> : vector<128x128xf32>
    %66 = tpu.matmul %63, %64, %cst_19 {dimension_numbers = #tpu.dot_dimension_numbers<[1], [1], [0], [0], [0, 0, 1, 0], [], []>} : vector<128x32xbf16>, vector<128x32xbf16>, vector<128x128xf32> -> vector<128x128xf32>
    %cst_20 = arith.constant dense<0xFF800000> : vector<128xf32>
    %67 = vector.multi_reduction <maximumf>, %66, %cst_20 [1] : vector<128x128xf32> to vector<128xf32>
    %68 = vector.shape_cast %67 : vector<128xf32> to vector<128x1xf32>
    %69 = vector.broadcast %68 : vector<128x1xf32> to vector<128x128xf32>
    %70 = arith.subf %66, %69 : vector<128x128xf32>
    %71 = math.exp %70 : vector<128x128xf32>
    %cst_21 = arith.constant dense<0.000000e+00> : vector<128xf32>
    %72 = vector.multi_reduction <add>, %71, %cst_21 [1] : vector<128x128xf32> to vector<128xf32>
    %73 = vector.shape_cast %72 : vector<128xf32> to vector<128x1xf32>
    %74 = tpu.reciprocal %73 : vector<128x1xf32> -> vector<128x1xf32>
    %75 = vector.broadcast %74 : vector<128x1xf32> to vector<128x128xf32>
    %76 = arith.mulf %71, %75 : vector<128x128xf32>
    %77 = arith.truncf %76 : vector<128x128xf32> to vector<128x128xbf16>
    %cst_22 = arith.constant dense<0.000000e+00> : vector<128x32xf32>
    %78 = tpu.matmul %77, %65, %cst_22 {dimension_numbers = #tpu.dot_dimension_numbers<[1], [0], [0], [1], [0, 0, 1, 1], [], []>} : vector<128x128xbf16>, vector<128x32xbf16>, vector<128x32xf32> -> vector<128x32xf32>
    %79 = tpu.concatenate %30, %46, %62, %78 in 1 : vector<128x32xf32>, vector<128x32xf32>, vector<128x32xf32>, vector<128x32xf32> -> vector<128x128xf32>
    %80 = arith.truncf %79 : vector<128x128xf32> to vector<128x128xbf16>
    %c0_23 = arith.constant 0 : index
    %c0_24 = arith.constant 0 : index
    %81 = vector.load %arg4[%c0_23, %c0_24] : memref<128x128xbf16, #tpu.memory_space<vmem>>, vector<128x128xbf16>
    %cst_25 = arith.constant dense<0.000000e+00> : vector<128x128xf32>
    %82 = tpu.matmul %80, %81, %cst_25 {dimension_numbers = #tpu.dot_dimension_numbers<[1], [0], [0], [1], [0, 0, 1, 1], [], []>} : vector<128x128xbf16>, vector<128x128xbf16>, vector<128x128xf32> -> vector<128x128xf32>
    %c0_26 = arith.constant 0 : index
    %c0_27 = arith.constant 0 : index
    %83 = vector.load %arg5[%c0_26, %c0_27] : memref<1x128xf32, #tpu.memory_space<vmem>>, vector<1x128xf32>
    %84 = vector.broadcast %83 : vector<1x128xf32> to vector<128x128xf32>
    %85 = arith.addf %82, %84 : vector<128x128xf32>
    %c0_28 = arith.constant 0 : index
    %c0_29 = arith.constant 0 : index
    %c0_30 = arith.constant 0 : index
    %86 = vector.load %arg6[%c0_28, %c0_29, %c0_30] : memref<1x128x128xf32, #tpu.memory_space<vmem>>, vector<1x128x128xf32>
    %87 = vector.shape_cast %86 : vector<1x128x128xf32> to vector<128x128xf32>
    %88 = vector.shape_cast %85 : vector<128x128xf32> to vector<1x128x128xf32>
    tpu.vector_store %arg6[%c0_28, %c0_29, %c0_30], %88 {strides = array<i32>} : memref<1x128x128xf32, #tpu.memory_space<vmem>>, vector<1x128x128xf32>,
    return
  }
  func.func @transform_0(%arg0: i32) -> (i32, i32, i32) {
    %c0_i32 = arith.constant 0 : i32
    %c0_i32_0 = arith.constant 0 : i32
    %c0_i32_1 = arith.constant 0 : i32
    return %arg0, %c0_i32, %c0_i32_0 : i32, i32, i32
  }
  func.func @transform_1(%arg0: i32) -> (i32, i32) {
    %c0_i32 = arith.constant 0 : i32
    %c0_i32_0 = arith.constant 0 : i32
    %c0_i32_1 = arith.constant 0 : i32
    return %c0_i32, %c0_i32_0 : i32, i32
  }
  func.func @transform_2(%arg0: i32) -> (i32, i32) {
    %c0_i32 = arith.constant 0 : i32
    %c0_i32_0 = arith.constant 0 : i32
    %c0_i32_1 = arith.constant 0 : i32
    return %c0_i32, %c0_i32_0 : i32, i32
  }
  func.func @transform_3(%arg0: i32) -> (i32, i32) {
    %c0_i32 = arith.constant 0 : i32
    %c0_i32_0 = arith.constant 0 : i32
    %c0_i32_1 = arith.constant 0 : i32
    return %c0_i32, %c0_i32_0 : i32, i32
  }
  func.func @transform_4(%arg0: i32) -> (i32, i32) {
    %c0_i32 = arith.constant 0 : i32
    %c0_i32_0 = arith.constant 0 : i32
    %c0_i32_1 = arith.constant 0 : i32
    return %c0_i32, %c0_i32_0 : i32, i32
  }
  func.func @transform_5(%arg0: i32) -> (i32, i32, i32) {
    %c0_i32 = arith.constant 0 : i32
    %c0_i32_0 = arith.constant 0 : i32
    %c0_i32_1 = arith.constant 0 : i32
    return %arg0, %c0_i32, %c0_i32_0 : i32, i32, i32
  }
}

</mosaic_0001>

<llo_original>
// kernel: tpu_custom_call.1
$region0: #{tpu_custom_call.1}
  #allocation0 [shape = 'u32[]', space=smem, size = 0x4, offset = 0x4, fixed_abs, tag = 'smem constant byte address 0x4 - core index']
  #allocation1 [shape = 'u32[144,128]{1,0:T(1,128)}', space=vmem, size = 0x12000, scoped, tag = 'internal scratch']
  %s0 = inlined_call_operand.hbm [shape: bf16[2,128,128], index: 0, kind: input, shape index: {}]
  %s1 = inlined_call_operand.hbm [shape: bf16[128,384], index: 1, kind: input, shape index: {}]
  %s2 = inlined_call_operand.vmem [shape: f32[1,384], index: 2, kind: input, shape index: {}]
  %s3 = inlined_call_operand.hbm [shape: bf16[128,128], index: 3, kind: input, shape index: {}]
  %s4 = inlined_call_operand.vmem [shape: f32[1,128], index: 4, kind: input, shape index: {}]
  %s5 = inlined_call_operand.hbm [shape: f32[2,128,128], index: 5, kind: output, shape index: {}]
  %s6 = sld [smem:[#allocation0]]
  $region65: #{tpu_custom_call.1} parent=0
    _
  %s8 = ssub.s32 1, %s6
  %s9 = scalar_select 0, %s8, %s6
  $region1: #{tpu_custom_call.1} parent=0
    #allocation2 [shape = 'u8[65536]{0}', space=vmem, size = 0x10000, scoped, tag = 'input window, operand 0']
    #allocation3 [shape = 's32[2]{0}', space=sflag, size = 0x8, scoped, tag = 'scoped memory for tpu_custom_call.1']
    #allocation4 [shape = 's32[2]{0}', space=sflag, size = 0x8, scoped, tag = 'scoped memory for tpu_custom_call.1']
    #allocation5 [shape = 'u8[98304]{0}', space=vmem, size = 0x18000, scoped, tag = 'input window, operand 1, single buffered']
    #allocation6 [shape = 's32[1]{0}', space=sflag, size = 0x4, scoped, tag = 'scoped memory for tpu_custom_call.1']
    #allocation7 [shape = 'u8[32768]{0}', space=vmem, size = 0x8000, scoped, tag = 'input window, operand 3, single buffered']
    #allocation8 [shape = 'u8[131072]{0}', space=vmem, size = 0x20000, scoped, tag = 'output window, operand 0']
    %10 = vsyncpa [#allocation3], 0
    %s11 = scalar_lea.sflag [#allocation3], 1
    %12 = vsyncpa %s11, 0
    %13 = vsyncpa [#allocation6], 0
    %14 = vsyncpa [#allocation4], 0
    %s15 = scalar_lea.sflag [#allocation4], 1
    %16 = vsyncpa %s15, 0
    loop: start=0, step=1, limit=4
    $region2: #{tpu_custom_call.1} parent=1 // loop_pre_header
      _
    $region3: #{tpu_custom_call.1} parent=1 // loop_header
      %s18 = sphi 0, %s22
      %p19 = scmp.ge.s32.totalorder %s18, 4
      %s28 = sphi 0, %s30
      %s31 = sphi 0, %s28
      %s32 = sphi 0, %s31
      %s48 = sphi 0, %s32
      %s52 = sphi 0, %s52
      %s54 = sphi 0, %s52
      %s55 = sphi 0, %s54
      %s69 = sphi 0, %s55
      %s73 = sphi 0, %s73
      %s75 = sphi 0, %s73
      %s76 = sphi 0, %s75
      %s90 = sphi 0, %s76
      %s94 = sphi 0, %s94
      %s96 = sphi 0, %s94
      %s97 = sphi 0, %s96
      %s111 = sphi 0, %s97
      %s115 = sphi 0, %s115
      %s117 = sphi 0, %s115
      %s118 = sphi 0, %s117
      %s132 = sphi 0, %s118
      %s138 = sphi 0, %s140
      %s141 = sphi 0, %s138
      %s142 = sphi 0, %s141
      %s158 = sphi 0, %s142
    $region4: #{tpu_custom_call.1} parent=1 // loop_header_branch
      %21 = sbr.rel (%p19) target = $region8
    $region5: #{tpu_custom_call.1} parent=1 // loop_body
      %s23 = ssub.s32 %s18, 1
      %s24 = ssub.s32 %s18, 2
      %s25 = sadd.s32 %s18, 1
      %s26 = ssub.s32 %s18, %s25
      %p27 = scmp.eq.s32.totalorder %s26, 0
      %s29 = sadd.s32 %s28, 1
      %s30 = scalar_select %p27, %s28, %s29
      %p33 = pneg %p27
      %p34 = scmp.eq.s32.totalorder %s18, 1
      %p35 = por %p33, %p34
      %p36 = scmp.ne.s32.totalorder %s28, %s31
      %p37 = scmp.eq.s32.totalorder %s18, 0
      %p38 = por %p36, %p37
      %p39 = scmp.ne.s32.totalorder %s28, %s31
      %p40 = scmp.eq.s32.totalorder %s23, 1
      %p41 = por %p39, %p40
      %p42 = scmp.ne.s32.totalorder %s31, %s32
      %p43 = scmp.eq.s32.totalorder %s23, 0
      %p44 = por %p42, %p43
      %p45 = scmp.ne.s32.totalorder %s31, %s32
      %p46 = scmp.eq.s32.totalorder %s24, 1
      %p47 = por %p45, %p46
      %p49 = scmp.ne.s32.totalorder %s32, %s48
      %p50 = scmp.eq.s32.totalorder %s24, 0
      %p51 = por %p49, %p50
      %s53 = sadd.s32 %s52, 1
      %p56 = scmp.eq.s32.totalorder %s18, 1
      %p57 = scmp.ne.s32.totalorder %s52, %s54
      %p58 = scmp.eq.s32.totalorder %s18, 0
      %p59 = por %p57, %p58
      %p60 = scmp.ne.s32.totalorder %s52, %s54
      %p61 = scmp.eq.s32.totalorder %s23, 1
      %p62 = por %p60, %p61
      %p63 = scmp.ne.s32.totalorder %s54, %s55
      %p64 = scmp.eq.s32.totalorder %s23, 0
      %p65 = por %p63, %p64
      %p66 = scmp.ne.s32.totalorder %s54, %s55
      %p67 = scmp.eq.s32.totalorder %s24, 1
      %p68 = por %p66, %p67
      %p70 = scmp.ne.s32.totalorder %s55, %s69
      %p71 = scmp.eq.s32.totalorder %s24, 0
      %p72 = por %p70, %p71
      %s74 = sadd.s32 %s73, 1
      %p77 = scmp.eq.s32.totalorder %s18, 1
      %p78 = scmp.ne.s32.totalorder %s73, %s75
      %p79 = scmp.eq.s32.totalorder %s18, 0
      %p80 = por %p78, %p79
      %p81 = scmp.ne.s32.totalorder %s73, %s75
      %p82 = scmp.eq.s32.totalorder %s23, 1
      %p83 = por %p81, %p82
      %p84 = scmp.ne.s32.totalorder %s75, %s76
      %p85 = scmp.eq.s32.totalorder %s23, 0
      %p86 = por %p84, %p85
      %p87 = scmp.ne.s32.totalorder %s75, %s76
      %p88 = scmp.eq.s32.totalorder %s24, 1
      %p89 = por %p87, %p88
      %p91 = scmp.ne.s32.totalorder %s76, %s90
      %p92 = scmp.eq.s32.totalorder %s24, 0
      %p93 = por %p91, %p92
      %s95 = sadd.s32 %s94, 1
      %p98 = scmp.eq.s32.totalorder %s18, 1
      %p99 = scmp.ne.s32.totalorder %s94, %s96
      %p100 = scmp.eq.s32.totalorder %s18, 0
      %p101 = por %p99, %p100
      %p102 = scmp.ne.s32.totalorder %s94, %s96
      %p103 = scmp.eq.s32.totalorder %s23, 1
      %p104 = por %p102, %p103
      %p105 = scmp.ne.s32.totalorder %s96, %s97
      %p106 = scmp.eq.s32.totalorder %s23, 0
      %p107 = por %p105, %p106
      %p108 = scmp.ne.s32.totalorder %s96, %s97
      %p109 = scmp.eq.s32.totalorder %s24, 1
      %p110 = por %p108, %p109
      %p112 = scmp.ne.s32.totalorder %s97, %s111
      %p113 = scmp.eq.s32.totalorder %s24, 0
      %p114 = por %p112, %p113
      %s116 = sadd.s32 %s115, 1
      %p119 = scmp.eq.s32.totalorder %s18, 1
      %p120 = scmp.ne.s32.totalorder %s115, %s117
      %p121 = scmp.eq.s32.totalorder %s18, 0
      %p122 = por %p120, %p121
      %p123 = scmp.ne.s32.totalorder %s115, %s117
      %p124 = scmp.eq.s32.totalorder %s23, 1
      %p125 = por %p123, %p124
      %p126 = scmp.ne.s32.totalorder %s117, %s118
      %p127 = scmp.eq.s32.totalorder %s23, 0
      %p128 = por %p126, %p127
      %p129 = scmp.ne.s32.totalorder %s117, %s118
      %p130 = scmp.eq.s32.totalorder %s24, 1
      %p131 = por %p129, %p130
      %p133 = scmp.ne.s32.totalorder %s118, %s132
      %p134 = scmp.eq.s32.totalorder %s24, 0
      %p135 = por %p133, %p134
      %s136 = ssub.s32 %s18, %s25
      %p137 = scmp.eq.s32.totalorder %s136, 0
      %s139 = sadd.s32 %s138, 1
      %s140 = scalar_select %p137, %s138, %s139
      %p143 = pneg %p137
      %p144 = scmp.eq.s32.totalorder %s18, 1
      %p145 = por %p143, %p144
      %p146 = scmp.ne.s32.totalorder %s138, %s141
      %p147 = scmp.eq.s32.totalorder %s18, 0
      %p148 = por %p146, %p147
      %p149 = scmp.ne.s32.totalorder %s138, %s141
      %p150 = scmp.eq.s32.totalorder %s23, 1
      %p151 = por %p149, %p150
      %p152 = scmp.ne.s32.totalorder %s141, %s142
      %p153 = scmp.eq.s32.totalorder %s23, 0
      %p154 = por %p152, %p153
      %p155 = scmp.ne.s32.totalorder %s141, %s142
      %p156 = scmp.eq.s32.totalorder %s24, 1
      %p157 = por %p155, %p156
      %p159 = scmp.ne.s32.totalorder %s142, %s158
      %p160 = scmp.eq.s32.totalorder %s24, 0
      %p161 = por %p159, %p160
      %p162 = scmp.le.s32.totalorder 1, %s18
      %p163 = scmp.lt.s32.totalorder %s18, 3
      %p164 = pnand %p162, %p163
      %p165 = pneg %p164
      // Predicated region
      $region9: #{tpu_custom_call.1} parent=5 // pred_check
        _
      $region10: #{tpu_custom_call.1} parent=5 // pred_check_branch
        %167 = sbr.rel (%p164) target = $region12
      $region11: #{tpu_custom_call.1} parent=5 // pred_region
        %s168 = ssub.s32 %s18, 1
        // Predicated region
        $region13: #{tpu_custom_call.1} parent=11 // pred_check
          %p169 = pneg %p65
        $region14: #{tpu_custom_call.1} parent=11 // pred_check_branch
          %171 = sbr.rel (%p169) target = $region16
        $region15: #{tpu_custom_call.1} parent=11 // pred_region
          %s173 = ssub.s32 3072, 3072
          %174 = vsyncadd [#allocation6], %s173
          %s175 = sshll.u32 [#allocation5], 4
          %s176 = int_to_ptr.vmem [resolvable:$true] %s175
          %181 = dma.hbm_to_vmem [thread:$0]  %s1, 3072, %s176, [#allocation6], 192, 192, 12
        $region16: #{tpu_custom_call.1} parent=11 // pred_fallthru
          _
        // Predicated region
        $region17: #{tpu_custom_call.1} parent=11 // pred_check
          %p182 = pneg %p86
        $region18: #{tpu_custom_call.1} parent=11 // pred_check_branch
          %184 = sbr.rel (%p182) target = $region20
        $region19: #{tpu_custom_call.1} parent=11 // pred_region
          _
        $region20: #{tpu_custom_call.1} parent=11 // pred_fallthru
          _
        // Predicated region
        $region21: #{tpu_custom_call.1} parent=11 // pred_check
          %p185 = pneg %p107
        $region22: #{tpu_custom_call.1} parent=11 // pred_check_branch
          %187 = sbr.rel (%p185) target = $region24
        $region23: #{tpu_custom_call.1} parent=11 // pred_region
          %s189 = ssub.s32 1024, 1024
          %190 = vsyncadd [#allocation6], %s189
          %s191 = sshll.u32 [#allocation7], 4
          %s192 = int_to_ptr.vmem [resolvable:$true] %s191
          %197 = dma.hbm_to_vmem [thread:$0]  %s3, 1024, %s192, [#allocation6], 64, 64, 4
        $region24: #{tpu_custom_call.1} parent=11 // pred_fallthru
          _
        // Predicated region
        $region25: #{tpu_custom_call.1} parent=11 // pred_check
          %p198 = pneg %p128
        $region26: #{tpu_custom_call.1} parent=11 // pred_check_branch
          %200 = sbr.rel (%p198) target = $region28
        $region27: #{tpu_custom_call.1} parent=11 // pred_region
          _
        $region28: #{tpu_custom_call.1} parent=11 // pred_fallthru
          _
      $region12: #{tpu_custom_call.1} parent=5 // pred_fallthru
        _
      %p201 = scmp.lt.s32.totalorder %s18, 2
      // Predicated region
      $region29: #{tpu_custom_call.1} parent=5 // pred_check
        %p202 = pneg %p201
      $region30: #{tpu_custom_call.1} parent=5 // pred_check_branch
        %204 = sbr.rel (%p202) target = $region32
      $region31: #{tpu_custom_call.1} parent=5 // pred_region
        // Predicated region
        $region33: #{tpu_custom_call.1} parent=31 // pred_check
          %p205 = pneg %p38
        $region34: #{tpu_custom_call.1} parent=31 // pred_check_branch
          %207 = sbr.rel (%p205) target = $region36
        $region35: #{tpu_custom_call.1} parent=31 // pred_region
          %s208 = sand.u32 %s28, 1
          %s209 = scalar_lea.sflag [#allocation3], %s208
          %s210 = sand.u32 %s28, 1
          %s211 = smul.addr %s210, 64
          %s212 = scalar_lea.vmem [#allocation2], %s211
          %s214 = ssub.s32 1024, 1024
          %215 = vsyncadd %s209, %s214
          %s216 = smul.addr %s18, 16
          %s217 = smul.addr %s216, 64
          %s218 = scalar_lea.hbm %s0, %s217
          %s219 = sshll.u32 %s212, 4
          %s220 = int_to_ptr.vmem [resolvable:$true] %s219
          %225 = dma.hbm_to_vmem [thread:$0]  %s218, 1024, %s220, %s209, 64, 64, 4
        $region36: #{tpu_custom_call.1} parent=31 // pred_fallthru
          _
      $region32: #{tpu_custom_call.1} parent=5 // pred_fallthru
        _
      %p226 = scmp.le.s32.totalorder 1, %s18
      %p227 = scmp.lt.s32.totalorder %s18, 3
      %p228 = pnand %p226, %p227
      %p229 = pneg %p228
      // Predicated region
      $region37: #{tpu_custom_call.1} parent=5 // pred_check
        _
      $region38: #{tpu_custom_call.1} parent=5 // pred_check_branch
        %231 = sbr.rel (%p228) target = $region40
      $region39: #{tpu_custom_call.1} parent=5 // pred_region
        %s232 = ssub.s32 %s18, 1
        %s233 = sand.u32 %s31, 1
        %s234 = scalar_lea.sflag [#allocation3], %s233
        %s235 = sand.u32 %s31, 1
        %s236 = smul.addr %s235, 64
        %s237 = scalar_lea.vmem [#allocation2], %s236
        // Predicated region
        $region41: #{tpu_custom_call.1} parent=39 // pred_check
          %p238 = pneg %p44
        $region42: #{tpu_custom_call.1} parent=39 // pred_check_branch
          %240 = sbr.rel (%p238) target = $region44
        $region43: #{tpu_custom_call.1} parent=39 // pred_region
          %241 = dma.done %s234, 1024
        $region44: #{tpu_custom_call.1} parent=39 // pred_fallthru
          _
        // Predicated region
        $region45: #{tpu_custom_call.1} parent=39 // pred_check
          %p242 = pneg %p65
        $region46: #{tpu_custom_call.1} parent=39 // pred_check_branch
          %244 = sbr.rel (%p242) target = $region48
        $region47: #{tpu_custom_call.1} parent=39 // pred_region
          %245 = dma.done [#allocation6], 3072
        $region48: #{tpu_custom_call.1} parent=39 // pred_fallthru
          _
        // Predicated region
        $region49: #{tpu_custom_call.1} parent=39 // pred_check
          %p246 = pneg %p107
        $region50: #{tpu_custom_call.1} parent=39 // pred_check_branch
          %248 = sbr.rel (%p246) target = $region52
        $region51: #{tpu_custom_call.1} parent=39 // pred_region
          %249 = dma.done [#allocation6], 1024
        $region52: #{tpu_custom_call.1} parent=39 // pred_fallthru
          _
        %s250 = sand.u32 %s31, 1
        %s251 = scalar_lea.sflag [#allocation3], %s250
        %s252 = sand.u32 %s31, 1
        %s253 = smul.addr %s252, 64
        %s254 = scalar_lea.vmem [#allocation2], %s253
        %p255 = pneg %p44
        %p256 = pneg %p41
        %p257 = pneg %p65
        %p258 = pneg %p62
        %p259 = pneg %p86
        %p260 = pneg %p83
        %p261 = pneg %p107
        %p262 = pneg %p104
        %p263 = pneg %p128
        %p264 = pneg %p125
        %p265 = pneg %p154
        %p266 = pneg %p151
        %s267 = sand.u32 %s141, 1
        %s268 = scalar_lea.sflag [#allocation4], %s267
        %s269 = sand.u32 %s141, 1
        %s270 = smul.addr %s269, 128
        %s271 = scalar_lea.vmem [#allocation8], %s270
        %v273 = vld [vmem:[%s237] sm:$0xf]
        %v274 = vld [vmem:[%s237 + $0x4] sm:$0xf]
        %v275 = vld [vmem:[%s237 + $0x8] sm:$0xf]
        %v276 = vld [vmem:[%s237 + $0xc] sm:$0xf]
        %v277 = vld [vmem:[%s237 + $0x10] sm:$0xf]
        %v278 = vld [vmem:[%s237 + $0x14] sm:$0xf]
        %v279 = vld [vmem:[%s237 + $0x18] sm:$0xf]
        %v280 = vld [vmem:[%s237 + $0x1c] sm:$0xf]
        %v281 = vld [vmem:[%s237 + $0x20] sm:$0xf]
        %v282 = vld [vmem:[%s237 + $0x24] sm:$0xf]
        %v283 = vld [vmem:[%s237 + $0x28] sm:$0xf]
        %v284 = vld [vmem:[%s237 + $0x2c] sm:$0xf]
        %v285 = vld [vmem:[%s237 + $0x30] sm:$0xf]
        %v286 = vld [vmem:[%s237 + $0x34] sm:$0xf]
        %v287 = vld [vmem:[%s237 + $0x38] sm:$0xf]
        %v288 = vld [vmem:[%s237 + $0x3c] sm:$0xf]
        %v289 = vld [vmem:[#allocation5] sm:$0xff]
        %v290 = vld [vmem:[#allocation5 + $0x8] sm:$0xf]
        %v291 = vld [vmem:[#allocation5 + $0xc] sm:$0xff]
        %v292 = vld [vmem:[#allocation5 + $0x14] sm:$0xf]
        %v293 = vld [vmem:[#allocation5 + $0x18] sm:$0xff]
        %v294 = vld [vmem:[#allocation5 + $0x20] sm:$0xf]
        %v295 = vld [vmem:[#allocation5 + $0x24] sm:$0xff]
        %v296 = vld [vmem:[#allocation5 + $0x2c] sm:$0xf]
        %v297 = vld [vmem:[#allocation5 + $0x30] sm:$0xff]
        %v298 = vld [vmem:[#allocation5 + $0x38] sm:$0xf]
        %v299 = vld [vmem:[#allocation5 + $0x3c] sm:$0xff]
        %v300 = vld [vmem:[#allocation5 + $0x44] sm:$0xf]
        %v301 = vld [vmem:[#allocation5 + $0x48] sm:$0xff]
        %v302 = vld [vmem:[#allocation5 + $0x50] sm:$0xf]
        %v303 = vld [vmem:[#allocation5 + $0x54] sm:$0xff]
        %v304 = vld [vmem:[#allocation5 + $0x5c] sm:$0xf]
        %v305 = vld [vmem:[#allocation5 + $0x60] sm:$0xff]
        %v306 = vld [vmem:[#allocation5 + $0x68] sm:$0xf]
        %v307 = vld [vmem:[#allocation5 + $0x6c] sm:$0xff]
        %v308 = vld [vmem:[#allocation5 + $0x74] sm:$0xf]
        %v309 = vld [vmem:[#allocation5 + $0x78] sm:$0xff]
        %v310 = vld [vmem:[#allocation5 + $0x80] sm:$0xf]
        %v311 = vld [vmem:[#allocation5 + $0x84] sm:$0xff]
        %v312 = vld [vmem:[#allocation5 + $0x8c] sm:$0xf]
        %v313 = vld [vmem:[#allocation5 + $0x90] sm:$0xff]
        %v314 = vld [vmem:[#allocation5 + $0x98] sm:$0xf]
        %v315 = vld [vmem:[#allocation5 + $0x9c] sm:$0xff]
        %v316 = vld [vmem:[#allocation5 + $0xa4] sm:$0xf]
        %v317 = vld [vmem:[#allocation5 + $0xa8] sm:$0xff]
        %v318 = vld [vmem:[#allocation5 + $0xb0] sm:$0xf]
        %v319 = vld [vmem:[#allocation5 + $0xb4] sm:$0xff]
        %v320 = vld [vmem:[#allocation5 + $0xbc] sm:$0xf]
        %v321 = vld [vmem:[%s2] sm:$0x7]
        %v323 = vlaneseq
        %v324 = vshrl.u32 %v323, 7
        %v325 = vsub.s32 0, %v324
        %v326 = vrot.slane %v321, %v325
        %v327 = vlaneseq
        %v328 = vshrl.u32 %v327, 7
        %v329 = vsub.s32 1, %v328
        %v330 = vrot.slane %v321, %v329
        %v331 = vlaneseq
        %v332 = vshrl.u32 %v331, 7
        %v333 = vsub.s32 2, %v332
        %v334 = vrot.slane %v321, %v333
        %v354 = vunpack.c.l.b16 %v273
        %v355 = vunpack.c.l.b16 %v274
        %v356 = vunpack.c.l.b16 %v275
        %v357 = vunpack.c.l.b16 %v276
        %v358 = vunpack.c.l.b16 %v277
        %v359 = vunpack.c.l.b16 %v278
        %v360 = vunpack.c.l.b16 %v279
        %v361 = vunpack.c.l.b16 %v280
        %v362 = vunpack.c.l.b16 %v281
        %v363 = vunpack.c.l.b16 %v282
        %v364 = vunpack.c.l.b16 %v283
        %v365 = vunpack.c.l.b16 %v284
        %v366 = vunpack.c.l.b16 %v285
        %v367 = vunpack.c.l.b16 %v286
        %v368 = vunpack.c.l.b16 %v287
        %v369 = vunpack.c.l.b16 %v288
        %v370 = vpack.c.b16 %v355, %v354
        %v371 = vpack.c.b16 %v357, %v356
        %v372 = vpack.c.b16 %v359, %v358
        %v373 = vpack.c.b16 %v361, %v360
        %v374 = vpack.c.b16 %v363, %v362
        %v375 = vpack.c.b16 %v365, %v364
        %v376 = vpack.c.b16 %v367, %v366
        %v377 = vpack.c.b16 %v369, %v368
        %v418 = vunpack.c.l.b16 %v289
        %v419 = vunpack.c.h.b16 %v289
        %v420 = vunpack.c.l.b16 %v290
        %v421 = vunpack.c.l.b16 %v291
        %v422 = vunpack.c.h.b16 %v291
        %v423 = vunpack.c.l.b16 %v292
        %v424 = vunpack.c.l.b16 %v293
        %v425 = vunpack.c.h.b16 %v293
        %v426 = vunpack.c.l.b16 %v294
        %v427 = vunpack.c.l.b16 %v295
        %v428 = vunpack.c.h.b16 %v295
        %v429 = vunpack.c.l.b16 %v296
        %v430 = vunpack.c.l.b16 %v297
        %v431 = vunpack.c.h.b16 %v297
        %v432 = vunpack.c.l.b16 %v298
        %v433 = vunpack.c.l.b16 %v299
        %v434 = vunpack.c.h.b16 %v299
        %v435 = vunpack.c.l.b16 %v300
        %v436 = vunpack.c.l.b16 %v301
        %v437 = vunpack.c.h.b16 %v301
        %v438 = vunpack.c.l.b16 %v302
        %v439 = vunpack.c.l.b16 %v303
        %v440 = vunpack.c.h.b16 %v303
        %v441 = vunpack.c.l.b16 %v304
        %v442 = vunpack.c.l.b16 %v305
        %v443 = vunpack.c.h.b16 %v305
        %v444 = vunpack.c.l.b16 %v306
        %v445 = vunpack.c.l.b16 %v307
        %v446 = vunpack.c.h.b16 %v307
        %v447 = vunpack.c.l.b16 %v308
        %v448 = vunpack.c.l.b16 %v309
        %v449 = vunpack.c.h.b16 %v309
        %v450 = vunpack.c.l.b16 %v310
        %v451 = vunpack.c.l.b16 %v311
        %v452 = vunpack.c.h.b16 %v311
        %v453 = vunpack.c.l.b16 %v312
        %v454 = vunpack.c.l.b16 %v313
        %v455 = vunpack.c.h.b16 %v313
        %v456 = vunpack.c.l.b16 %v314
        %v457 = vunpack.c.l.b16 %v315
        %v458 = vunpack.c.h.b16 %v315
        %v459 = vunpack.c.l.b16 %v316
        %v460 = vunpack.c.l.b16 %v317
        %v461 = vunpack.c.h.b16 %v317
        %v462 = vunpack.c.l.b16 %v318
        %v463 = vunpack.c.l.b16 %v319
        %v464 = vunpack.c.h.b16 %v319
        %v465 = vunpack.c.l.b16 %v320
        %v466 = vpack.c.b16 %v421, %v418
        %v467 = vpack.c.b16 %v422, %v419
        %v468 = vpack.c.b16 %v423, %v420
        %v469 = vpack.c.b16 %v427, %v424
        %v470 = vpack.c.b16 %v428, %v425
        %v471 = vpack.c.b16 %v429, %v426
        %v472 = vpack.c.b16 %v433, %v430
        %v473 = vpack.c.b16 %v434, %v431
        %v474 = vpack.c.b16 %v435, %v432
        %v475 = vpack.c.b16 %v439, %v436
        %v476 = vpack.c.b16 %v440, %v437
        %v477 = vpack.c.b16 %v441, %v438
        %v478 = vpack.c.b16 %v445, %v442
        %v479 = vpack.c.b16 %v446, %v443
        %v480 = vpack.c.b16 %v447, %v444
        %v481 = vpack.c.b16 %v451, %v448
        %v482 = vpack.c.b16 %v452, %v449
        %v483 = vpack.c.b16 %v453, %v450
        %v484 = vpack.c.b16 %v457, %v454
        %v485 = vpack.c.b16 %v458, %v455
        %v486 = vpack.c.b16 %v459, %v456
        %v487 = vpack.c.b16 %v463, %v460
        %v488 = vpack.c.b16 %v464, %v461
        %v489 = vpack.c.b16 %v465, %v462
        %514 = vmatprep.subr.bf16.mxu0 %v467
        %515 = vmatpush1.bf16.msra.mxu0 %v466
        %516 = vmatprep.subr.bf16.mxu0 %v470
        %517 = vmatpush1.bf16.msra.mxu0 %v469
        %518 = vmatprep.subr.bf16.mxu0 %v473
        %519 = vmatpush1.bf16.msra.mxu0 %v472
        %520 = vmatprep.subr.bf16.mxu0 %v476
        %521 = vmatpush1.bf16.msra.mxu0 %v475
        %522 = vmatprep.subr.bf16.mxu0 %v479
        %523 = vmatpush1.bf16.msra.mxu0 %v478
        %524 = vmatprep.subr.bf16.mxu0 %v482
        %525 = vmatpush1.bf16.msra.mxu0 %v481
        %526 = vmatprep.subr.bf16.mxu0 %v485
        %527 = vmatpush1.bf16.msra.mxu0 %v484
        %528 = vmatprep.subr.bf16.mxu0 %v488
        %529 = vmatpush1.bf16.msra.mxu0 %v487
        %530 = vmatprep.subr.bf16.mxu0 0
        %531 = vmatpush1.bf16.msra.mxu0 0
        %532 = vmatprep.subr.bf16.mxu0 0
        %533 = vmatpush1.bf16.msra.mxu0 0
        %534 = vmatprep.subr.bf16.mxu0 0
        %535 = vmatpush1.bf16.msra.mxu0 0
        %536 = vmatprep.subr.bf16.mxu0 0
        %537 = vmatpush1.bf16.msra.mxu0 0
        %538 = vmatprep.subr.bf16.mxu0 0
        %539 = vmatpush1.bf16.msra.mxu0 0
        %540 = vmatprep.subr.bf16.mxu0 0
        %541 = vmatpush1.bf16.msra.mxu0 0
        %542 = vmatprep.subr.bf16.mxu0 0
        %543 = vmatpush1.bf16.msra.mxu0 0
        %544 = vmatprep.subr.bf16.mxu0 0
        %545 = vmatpush1.bf16.msra.mxu0 0
        %546 = vmatprep.mubr.bf16.mxu0 0
        %547 = vmatmul.mubr.bf16.gmra.mrb[0].mxu0 %v370
        %v548 = vpop.f32.mrb[0].mxu0
        %v549 = vadd.f32 %v326, %v548
        %v550 = vpop.f32.mrb[0].mxu0
        %v551 = vadd.f32 %v330, %v550
        %v552 = vpop.f32.mrb[0].mxu0
        %v553 = vadd.f32 %v326, %v552
        %v554 = vpop.f32.mrb[0].mxu0
        %v555 = vadd.f32 %v330, %v554
        %556 = vmatprep.mubr.bf16.mxu0 0
        %557 = vmatmul.mubr.bf16.gmra.mrb[0].mxu0 %v371
        %v558 = vpop.f32.mrb[0].mxu0
        %v559 = vadd.f32 %v326, %v558
        %v560 = vpop.f32.mrb[0].mxu0
        %v561 = vadd.f32 %v330, %v560
        %v562 = vpop.f32.mrb[0].mxu0
        %v563 = vadd.f32 %v326, %v562
        %v564 = vpop.f32.mrb[0].mxu0
        %v565 = vadd.f32 %v330, %v564
        %566 = vmatprep.mubr.bf16.mxu0 0
        %567 = vmatmul.mubr.bf16.gmra.mrb[0].mxu0 %v372
        %v568 = vpop.f32.mrb[0].mxu0
        %v569 = vadd.f32 %v326, %v568
        %v570 = vpop.f32.mrb[0].mxu0
        %v571 = vadd.f32 %v330, %v570
        %v572 = vpop.f32.mrb[0].mxu0
        %v573 = vadd.f32 %v326, %v572
        %v574 = vpop.f32.mrb[0].mxu0
        %v575 = vadd.f32 %v330, %v574
        %576 = vmatprep.mubr.bf16.mxu0 0
        %577 = vmatmul.mubr.bf16.gmra.mrb[0].mxu0 %v373
        %v578 = vpop.f32.mrb[0].mxu0
        %v579 = vadd.f32 %v326, %v578
        %v580 = vpop.f32.mrb[0].mxu0
        %v581 = vadd.f32 %v330, %v580
        %v582 = vpop.f32.mrb[0].mxu0
        %v583 = vadd.f32 %v326, %v582
        %v584 = vpop.f32.mrb[0].mxu0
        %v585 = vadd.f32 %v330, %v584
        %586 = vmatprep.mubr.bf16.mxu0 0
        %587 = vmatmul.mubr.bf16.gmra.mrb[0].mxu0 %v374
        %v588 = vpop.f32.mrb[0].mxu0
        %v589 = vadd.f32 %v326, %v588
        %v590 = vpop.f32.mrb[0].mxu0
        %v591 = vadd.f32 %v330, %v590
        %v592 = vpop.f32.mrb[0].mxu0
        %v593 = vadd.f32 %v326, %v592
        %v594 = vpop.f32.mrb[0].mxu0
        %v595 = vadd.f32 %v330, %v594
        %596 = vmatprep.mubr.bf16.mxu0 0
        %597 = vmatmul.mubr.bf16.gmra.mrb[0].mxu0 %v375
        %v598 = vpop.f32.mrb[0].mxu0
        %v599 = vadd.f32 %v326, %v598
        %v600 = vpop.f32.mrb[0].mxu0
        %v601 = vadd.f32 %v330, %v600
        %v602 = vpop.f32.mrb[0].mxu0
        %v603 = vadd.f32 %v326, %v602
        %v604 = vpop.f32.mrb[0].mxu0
        %v605 = vadd.f32 %v330, %v604
        %606 = vmatprep.mubr.bf16.mxu0 0
        %607 = vmatmul.mubr.bf16.gmra.mrb[0].mxu0 %v376
        %v608 = vpop.f32.mrb[0].mxu0
        %v609 = vadd.f32 %v326, %v608
        %v610 = vpop.f32.mrb[0].mxu0
        %v611 = vadd.f32 %v330, %v610
        %v612 = vpop.f32.mrb[0].mxu0
        %v613 = vadd.f32 %v326, %v612
        %v614 = vpop.f32.mrb[0].mxu0
        %v615 = vadd.f32 %v330, %v614
        %616 = vmatprep.mubr.bf16.mxu0 0
        %617 = vmatmul.mubr.bf16.gmra.mrb[0].mxu0 %v377
        %v618 = vpop.f32.mrb[0].mxu0
        %v619 = vadd.f32 %v326, %v618
        %v620 = vpop.f32.mrb[0].mxu0
        %v621 = vadd.f32 %v330, %v620
        %v622 = vpop.f32.mrb[0].mxu0
        %v623 = vadd.f32 %v326, %v622
        %v624 = vpop.f32.mrb[0].mxu0
        %v625 = vadd.f32 %v330, %v624
        %626 = vdwg.mxu0
        %627 = vmatprep.subr.bf16.mxu0 0
        %628 = vmatpush1.bf16.msra.mxu0 %v468
        %629 = vmatprep.subr.bf16.mxu0 0
        %630 = vmatpush1.bf16.msra.mxu0 %v471
        %631 = vmatprep.subr.bf16.mxu0 0
        %632 = vmatpush1.bf16.msra.mxu0 %v474
        %633 = vmatprep.subr.bf16.mxu0 0
        %634 = vmatpush1.bf16.msra.mxu0 %v477
        %635 = vmatprep.subr.bf16.mxu0 0
        %636 = vmatpush1.bf16.msra.mxu0 %v480
        %637 = vmatprep.subr.bf16.mxu0 0
        %638 = vmatpush1.bf16.msra.mxu0 %v483
        %639 = vmatprep.subr.bf16.mxu0 0
        %640 = vmatpush1.bf16.msra.mxu0 %v486
        %641 = vmatprep.subr.bf16.mxu0 0
        %642 = vmatpush1.bf16.msra.mxu0 %v489
        %643 = vmatprep.subr.bf16.mxu0 0
        %644 = vmatpush1.bf16.msra.mxu0 0
        %645 = vmatprep.subr.bf16.mxu0 0
        %646 = vmatpush1.bf16.msra.mxu0 0
        %647 = vmatprep.subr.bf16.mxu0 0
        %648 = vmatpush1.bf16.msra.mxu0 0
        %649 = vmatprep.subr.bf16.mxu0 0
        %650 = vmatpush1.bf16.msra.mxu0 0
        %651 = vmatprep.subr.bf16.mxu0 0
        %652 = vmatpush1.bf16.msra.mxu0 0
        %653 = vmatprep.subr.bf16.mxu0 0
        %654 = vmatpush1.bf16.msra.mxu0 0
        %655 = vmatprep.subr.bf16.mxu0 0
        %656 = vmatpush1.bf16.msra.mxu0 0
        %657 = vmatprep.subr.bf16.mxu0 0
        %658 = vmatpush1.bf16.msra.mxu0 0
        %659 = vmatprep.mubr.bf16.mxu0 0
        %660 = vmatmul.mubr.bf16.gmra.mrb[0].mxu0 %v370
        %v661 = vpop.f32.mrb[0].mxu0
        %v662 = vadd.f32 %v334, %v661
        %v663 = vpop.f32.mrb[0].mxu0
        %v664 = vpop.f32.mrb[0].mxu0
        %v665 = vadd.f32 %v334, %v664
        %v666 = vpop.f32.mrb[0].mxu0
        %667 = vmatprep.mubr.bf16.mxu0 0
        %668 = vmatmul.mubr.bf16.gmra.mrb[0].mxu0 %v371
        %v669 = vpop.f32.mrb[0].mxu0
        %v670 = vadd.f32 %v334, %v669
        %v671 = vpop.f32.mrb[0].mxu0
        %v672 = vpop.f32.mrb[0].mxu0
        %v673 = vadd.f32 %v334, %v672
        %v674 = vpop.f32.mrb[0].mxu0
        %675 = vmatprep.mubr.bf16.mxu0 0
        %676 = vmatmul.mubr.bf16.gmra.mrb[0].mxu0 %v372
        %v677 = vpop.f32.mrb[0].mxu0
        %v678 = vadd.f32 %v334, %v677
        %v679 = vpop.f32.mrb[0].mxu0
        %v680 = vpop.f32.mrb[0].mxu0
        %v681 = vadd.f32 %v334, %v680
        %v682 = vpop.f32.mrb[0].mxu0
        %683 = vmatprep.mubr.bf16.mxu0 0
        %684 = vmatmul.mubr.bf16.gmra.mrb[0].mxu0 %v373
        %v685 = vpop.f32.mrb[0].mxu0
        %v686 = vadd.f32 %v334, %v685
        %v687 = vpop.f32.mrb[0].mxu0
        %v688 = vpop.f32.mrb[0].mxu0
        %v689 = vadd.f32 %v334, %v688
        %v690 = vpop.f32.mrb[0].mxu0
        %691 = vmatprep.mubr.bf16.mxu0 0
        %692 = vmatmul.mubr.bf16.gmra.mrb[0].mxu0 %v374
        %v693 = vpop.f32.mrb[0].mxu0
        %v694 = vadd.f32 %v334, %v693
        %v695 = vpop.f32.mrb[0].mxu0
        %v696 = vpop.f32.mrb[0].mxu0
        %v697 = vadd.f32 %v334, %v696
        %v698 = vpop.f32.mrb[0].mxu0
        %699 = vmatprep.mubr.bf16.mxu0 0
        %700 = vmatmul.mubr.bf16.gmra.mrb[0].mxu0 %v375
        %v701 = vpop.f32.mrb[0].mxu0
        %v702 = vadd.f32 %v334, %v701
        %v703 = vpop.f32.mrb[0].mxu0
        %v704 = vpop.f32.mrb[0].mxu0
        %v705 = vadd.f32 %v334, %v704
        %v706 = vpop.f32.mrb[0].mxu0
        %707 = vmatprep.mubr.bf16.mxu0 0
        %708 = vmatmul.mubr.bf16.gmra.mrb[0].mxu0 %v376
        %v709 = vpop.f32.mrb[0].mxu0
        %v710 = vadd.f32 %v334, %v709
        %v711 = vpop.f32.mrb[0].mxu0
        %v712 = vpop.f32.mrb[0].mxu0
        %v713 = vadd.f32 %v334, %v712
        %v714 = vpop.f32.mrb[0].mxu0
        %715 = vmatprep.mubr.bf16.mxu0 0
        %716 = vmatmul.mubr.bf16.gmra.mrb[0].mxu0 %v377
        %v717 = vpop.f32.mrb[0].mxu0
        %v718 = vadd.f32 %v334, %v717
        %v719 = vpop.f32.mrb[0].mxu0
        %v720 = vpop.f32.mrb[0].mxu0
        %v721 = vadd.f32 %v334, %v720
        %v722 = vpop.f32.mrb[0].mxu0
        %723 = vdwg.mxu0
        %v724 = vmul.f32 %v549, 0.17677669
        %v725 = vmul.f32 %v553, 0.17677669
        %v726 = vmul.f32 %v559, 0.17677669
        %v727 = vmul.f32 %v563, 0.17677669
        %v728 = vmul.f32 %v569, 0.17677669
        %v729 = vmul.f32 %v573, 0.17677669
        %v730 = vmul.f32 %v579, 0.17677669
        %v731 = vmul.f32 %v583, 0.17677669
        %v732 = vmul.f32 %v589, 0.17677669
        %v733 = vmul.f32 %v593, 0.17677669
        %v734 = vmul.f32 %v599, 0.17677669
        %v735 = vmul.f32 %v603, 0.17677669
        %v736 = vmul.f32 %v609, 0.17677669
        %v737 = vmul.f32 %v613, 0.17677669
        %v738 = vmul.f32 %v619, 0.17677669
        %v739 = vmul.f32 %v623, 0.17677669
        %v740 = vpack.c.bf16 %v725, %v724
        %v741 = vpack.c.bf16 %v727, %v726
        %v742 = vpack.c.bf16 %v729, %v728
        %v743 = vpack.c.bf16 %v731, %v730
        %v744 = vpack.c.bf16 %v733, %v732
        %v745 = vpack.c.bf16 %v735, %v734
        %v746 = vpack.c.bf16 %v737, %v736
        %v747 = vpack.c.bf16 %v739, %v738
        %v748 = vpack.c.bf16 %v555, %v551
        %v749 = vpack.c.bf16 %v565, %v561
        %v750 = vpack.c.bf16 %v575, %v571
        %v751 = vpack.c.bf16 %v585, %v581
        %v752 = vpack.c.bf16 %v595, %v591
        %v753 = vpack.c.bf16 %v605, %v601
        %v754 = vpack.c.bf16 %v615, %v611
        %v755 = vpack.c.bf16 %v625, %v621
        %v756 = vpack.c.bf16 %v665, %v662
        %v757 = vpack.c.bf16 %v673, %v670
        %v758 = vpack.c.bf16 %v681, %v678
        %v759 = vpack.c.bf16 %v689, %v686
        %v760 = vpack.c.bf16 %v697, %v694
        %v761 = vpack.c.bf16 %v705, %v702
        %v762 = vpack.c.bf16 %v713, %v710
        %v763 = vpack.c.bf16 %v721, %v718
        %vm764 = vcmask 261120
        %v766 = vsel %vm764, %v740, 0
        %v769 = vsel %vm764, %v741, 0
        %v772 = vsel %vm764, %v742, 0
        %v775 = vsel %vm764, %v743, 0
        %v778 = vsel %vm764, %v744, 0
        %v781 = vsel %vm764, %v745, 0
        %v784 = vsel %vm764, %v746, 0
        %v787 = vsel %vm764, %v747, 0
        %v790 = vsel %vm764, %v748, 0
        %v793 = vsel %vm764, %v749, 0
        %v796 = vsel %vm764, %v750, 0
        %v799 = vsel %vm764, %v751, 0
        %v802 = vsel %vm764, %v752, 0
        %v805 = vsel %vm764, %v753, 0
        %v808 = vsel %vm764, %v754, 0
        %v811 = vsel %vm764, %v755, 0
        %813 = vmatprep.subr.bf16.mxu0 0
        %814 = vmatpush1.bf16.xpose.msra.mxu0 %v790
        %815 = vmatprep.subr.bf16.mxu0 0
        %816 = vmatpush1.bf16.xpose.msra.mxu0 %v793
        %817 = vmatprep.subr.bf16.mxu0 0
        %818 = vmatpush1.bf16.xpose.msra.mxu0 %v796
        %819 = vmatprep.subr.bf16.mxu0 0
        %820 = vmatpush1.bf16.xpose.msra.mxu0 %v799
        %821 = vmatprep.subr.bf16.mxu0 0
        %822 = vmatpush1.bf16.xpose.msra.mxu0 %v802
        %823 = vmatprep.subr.bf16.mxu0 0
        %824 = vmatpush1.bf16.xpose.msra.mxu0 %v805
        %825 = vmatprep.subr.bf16.mxu0 0
        %826 = vmatpush1.bf16.xpose.msra.mxu0 %v808
        %827 = vmatprep.subr.bf16.mxu0 0
        %828 = vmatpush1.bf16.xpose.msra.mxu0 %v811
        %829 = vmatprep.subr.bf16.mxu0 0
        %830 = vmatpush1.bf16.xpose.msra.mxu0 0
        %831 = vmatprep.subr.bf16.mxu0 0
        %832 = vmatpush1.bf16.xpose.msra.mxu0 0
        %833 = vmatprep.subr.bf16.mxu0 0
        %834 = vmatpush1.bf16.xpose.msra.mxu0 0
        %835 = vmatprep.subr.bf16.mxu0 0
        %836 = vmatpush1.bf16.xpose.msra.mxu0 0
        %837 = vmatprep.subr.bf16.mxu0 0
        %838 = vmatpush1.bf16.xpose.msra.mxu0 0
        %839 = vmatprep.subr.bf16.mxu0 0
        %840 = vmatpush1.bf16.xpose.msra.mxu0 0
        %841 = vmatprep.subr.bf16.mxu0 0
        %842 = vmatpush1.bf16.xpose.msra.mxu0 0
        %843 = vmatprep.subr.bf16.mxu0 0
        %844 = vmatpush1.bf16.xpose.msra.mxu0 0
        %845 = vmatprep.mubr.bf16.mxu0 0
        %846 = vmatmul.mubr.bf16.gmra.mrb[0].mxu0 %v766
        %v847 = vpop.f32.mrb[0].mxu0
        %v848 = vadd.f32 0.0, %v847
        %v849 = vpop.f32.mrb[0].mxu0
        %v850 = vpop.f32.mrb[0].mxu0
        %v851 = vadd.f32 0.0, %v850
        %v852 = vpop.f32.mrb[0].mxu0
        %853 = vmatprep.mubr.bf16.mxu0 0
        %854 = vmatmul.mubr.bf16.gmra.mrb[0].mxu0 %v769
        %v855 = vpop.f32.mrb[0].mxu0
        %v856 = vadd.f32 0.0, %v855
        %v857 = vpop.f32.mrb[0].mxu0
        %v858 = vpop.f32.mrb[0].mxu0
        %v859 = vadd.f32 0.0, %v858
        %v860 = vpop.f32.mrb[0].mxu0
        %861 = vmatprep.mubr.bf16.mxu0 0
        %862 = vmatmul.mubr.bf16.gmra.mrb[0].mxu0 %v772
        %v863 = vpop.f32.mrb[0].mxu0
        %v864 = vadd.f32 0.0, %v863
        %v865 = vpop.f32.mrb[0].mxu0
        %v866 = vpop.f32.mrb[0].mxu0
        %v867 = vadd.f32 0.0, %v866
        %v868 = vpop.f32.mrb[0].mxu0
        %869 = vmatprep.mubr.bf16.mxu0 0
        %870 = vmatmul.mubr.bf16.gmra.mrb[0].mxu0 %v775
        %v871 = vpop.f32.mrb[0].mxu0
        %v872 = vadd.f32 0.0, %v871
        %v873 = vpop.f32.mrb[0].mxu0
        %v874 = vpop.f32.mrb[0].mxu0
        %v875 = vadd.f32 0.0, %v874
        %v876 = vpop.f32.mrb[0].mxu0
        %877 = vmatprep.mubr.bf16.mxu0 0
        %878 = vmatmul.mubr.bf16.gmra.mrb[0].mxu0 %v778
        %v879 = vpop.f32.mrb[0].mxu0
        %v880 = vadd.f32 0.0, %v879
        %v881 = vpop.f32.mrb[0].mxu0
        %v882 = vpop.f32.mrb[0].mxu0
        %v883 = vadd.f32 0.0, %v882
        %v884 = vpop.f32.mrb[0].mxu0
        %885 = vmatprep.mubr.bf16.mxu0 0
        %886 = vmatmul.mubr.bf16.gmra.mrb[0].mxu0 %v781
        %v887 = vpop.f32.mrb[0].mxu0
        %v888 = vadd.f32 0.0, %v887
        %v889 = vpop.f32.mrb[0].mxu0
        %v890 = vpop.f32.mrb[0].mxu0
        %v891 = vadd.f32 0.0, %v890
        %v892 = vpop.f32.mrb[0].mxu0
        %893 = vmatprep.mubr.bf16.mxu0 0
        %894 = vmatmul.mubr.bf16.gmra.mrb[0].mxu0 %v784
        %v895 = vpop.f32.mrb[0].mxu0
        %v896 = vadd.f32 0.0, %v895
        %v897 = vpop.f32.mrb[0].mxu0
        %v898 = vpop.f32.mrb[0].mxu0
        %v899 = vadd.f32 0.0, %v898
        %v900 = vpop.f32.mrb[0].mxu0
        %901 = vmatprep.mubr.bf16.mxu0 0
        %902 = vmatmul.mubr.bf16.gmra.mrb[0].mxu0 %v787
        %v903 = vpop.f32.mrb[0].mxu0
        %v904 = vadd.f32 0.0, %v903
        %v905 = vpop.f32.mrb[0].mxu0
        %v906 = vpop.f32.mrb[0].mxu0
        %v907 = vadd.f32 0.0, %v906
        %v908 = vpop.f32.mrb[0].mxu0
        %909 = vdwg.mxu0
        %910 = vmax.xlane.f32.xlu0 %v848
        %v911 = vpop.xlane.xlu0 %910
        %912 = vmax.xlane.f32.xlu0 %v851
        %v913 = vpop.xlane.xlu0 %912
        %914 = vmax.xlane.f32.xlu0 %v856
        %v915 = vpop.xlane.xlu0 %914
        %916 = vmax.xlane.f32.xlu0 %v859
        %v917 = vpop.xlane.xlu0 %916
        %918 = vmax.xlane.f32.xlu0 %v864
        %v919 = vpop.xlane.xlu0 %918
        %920 = vmax.xlane.f32.xlu0 %v867
        %v921 = vpop.xlane.xlu0 %920
        %922 = vmax.xlane.f32.xlu0 %v872
        %v923 = vpop.xlane.xlu0 %922
        %924 = vmax.xlane.f32.xlu0 %v875
        %v925 = vpop.xlane.xlu0 %924
        %926 = vmax.xlane.f32.xlu0 %v880
        %v927 = vpop.xlane.xlu0 %926
        %928 = vmax.xlane.f32.xlu0 %v883
        %v929 = vpop.xlane.xlu0 %928
        %930 = vmax.xlane.f32.xlu0 %v888
        %v931 = vpop.xlane.xlu0 %930
        %932 = vmax.xlane.f32.xlu0 %v891
        %v933 = vpop.xlane.xlu0 %932
        %934 = vmax.xlane.f32.xlu0 %v896
        %v935 = vpop.xlane.xlu0 %934
        %936 = vmax.xlane.f32.xlu0 %v899
        %v937 = vpop.xlane.xlu0 %936
        %938 = vmax.xlane.f32.xlu0 %v904
        %v939 = vpop.xlane.xlu0 %938
        %940 = vmax.xlane.f32.xlu0 %v907
        %v941 = vpop.xlane.xlu0 %940
        %v942 = vsub.f32 %v848, %v911
        %v943 = vsub.f32 %v851, %v913
        %v944 = vsub.f32 %v856, %v915
        %v945 = vsub.f32 %v859, %v917
        %v946 = vsub.f32 %v864, %v919
        %v947 = vsub.f32 %v867, %v921
        %v948 = vsub.f32 %v872, %v923
        %v949 = vsub.f32 %v875, %v925
        %v950 = vsub.f32 %v880, %v927
        %v951 = vsub.f32 %v883, %v929
        %v952 = vsub.f32 %v888, %v931
        %v953 = vsub.f32 %v891, %v933
        %v954 = vsub.f32 %v896, %v935
        %v955 = vsub.f32 %v899, %v937
        %v956 = vsub.f32 %v904, %v939
        %v957 = vsub.f32 %v907, %v941
        %v958 = vmul.f32 %v942, 1.442695
        %v959 = vpow.pop %v958
        %v960 = vmul.f32 %v943, 1.442695
        %v961 = vpow.pop %v960
        %v962 = vmul.f32 %v944, 1.442695
        %v963 = vpow.pop %v962
        %v964 = vmul.f32 %v945, 1.442695
        %v965 = vpow.pop %v964
        %v966 = vmul.f32 %v946, 1.442695
        %v967 = vpow.pop %v966
        %v968 = vmul.f32 %v947, 1.442695
        %v969 = vpow.pop %v968
        %v970 = vmul.f32 %v948, 1.442695
        %v971 = vpow.pop %v970
        %v972 = vmul.f32 %v949, 1.442695
        %v973 = vpow.pop %v972
        %v974 = vmul.f32 %v950, 1.442695
        %v975 = vpow.pop %v974
        %v976 = vmul.f32 %v951, 1.442695
        %v977 = vpow.pop %v976
        %v978 = vmul.f32 %v952, 1.442695
        %v979 = vpow.pop %v978
        %v980 = vmul.f32 %v953, 1.442695
        %v981 = vpow.pop %v980
        %v982 = vmul.f32 %v954, 1.442695
        %v983 = vpow.pop %v982
        %v984 = vmul.f32 %v955, 1.442695
        %v985 = vpow.pop %v984
        %v986 = vmul.f32 %v956, 1.442695
        %v987 = vpow.pop %v986
        %v988 = vmul.f32 %v957, 1.442695
        %v989 = vpow.pop %v988
        %990 = vadd.xlane.f32.xlu0 %v959
        %v991 = vpop.xlane.xlu0 %990
        %992 = vadd.xlane.f32.xlu0 %v961
        %v993 = vpop.xlane.xlu0 %992
        %994 = vadd.xlane.f32.xlu0 %v963
        %v995 = vpop.xlane.xlu0 %994
        %996 = vadd.xlane.f32.xlu0 %v965
        %v997 = vpop.xlane.xlu0 %996
        %998 = vadd.xlane.f32.xlu0 %v967
        %v999 = vpop.xlane.xlu0 %998
        %1000 = vadd.xlane.f32.xlu0 %v969
        %v1001 = vpop.xlane.xlu0 %1000
        %1002 = vadd.xlane.f32.xlu0 %v971
        %v1003 = vpop.xlane.xlu0 %1002
        %1004 = vadd.xlane.f32.xlu0 %v973
        %v1005 = vpop.xlane.xlu0 %1004
        %1006 = vadd.xlane.f32.xlu0 %v975
        %v1007 = vpop.xlane.xlu0 %1006
        %1008 = vadd.xlane.f32.xlu0 %v977
        %v1009 = vpop.xlane.xlu0 %1008
        %1010 = vadd.xlane.f32.xlu0 %v979
        %v1011 = vpop.xlane.xlu0 %1010
        %1012 = vadd.xlane.f32.xlu0 %v981
        %v1013 = vpop.xlane.xlu0 %1012
        %1014 = vadd.xlane.f32.xlu0 %v983
        %v1015 = vpop.xlane.xlu0 %1014
        %1016 = vadd.xlane.f32.xlu0 %v985
        %v1017 = vpop.xlane.xlu0 %1016
        %1018 = vadd.xlane.f32.xlu0 %v987
        %v1019 = vpop.xlane.xlu0 %1018
        %1020 = vadd.xlane.f32.xlu0 %v989
        %v1021 = vpop.xlane.xlu0 %1020
        %v1022 = vrcp.pop %v991
        %v1023 = vrcp.pop %v993
        %v1024 = vrcp.pop %v995
        %v1025 = vrcp.pop %v997
        %v1026 = vrcp.pop %v999
        %v1027 = vrcp.pop %v1001
        %v1028 = vrcp.pop %v1003
        %v1029 = vrcp.pop %v1005
        %v1030 = vrcp.pop %v1007
        %v1031 = vrcp.pop %v1009
        %v1032 = vrcp.pop %v1011
        %v1033 = vrcp.pop %v1013
        %v1034 = vrcp.pop %v1015
        %v1035 = vrcp.pop %v1017
        %v1036 = vrcp.pop %v1019
        %v1037 = vrcp.pop %v1021
        %v1038 = vmul.f32 %v959, %v1022
        %v1039 = vmul.f32 %v961, %v1023
        %v1040 = vmul.f32 %v963, %v1024
        %v1041 = vmul.f32 %v965, %v1025
        %v1042 = vmul.f32 %v967, %v1026
        %v1043 = vmul.f32 %v969, %v1027
        %v1044 = vmul.f32 %v971, %v1028
        %v1045 = vmul.f32 %v973, %v1029
        %v1046 = vmul.f32 %v975, %v1030
        %v1047 = vmul.f32 %v977, %v1031
        %v1048 = vmul.f32 %v979, %v1032
        %v1049 = vmul.f32 %v981, %v1033
        %v1050 = vmul.f32 %v983, %v1034
        %v1051 = vmul.f32 %v985, %v1035
        %v1052 = vmul.f32 %v987, %v1036
        %v1053 = vmul.f32 %v989, %v1037
        %v1054 = vpack.c.bf16 %v1039, %v1038
        %v1055 = vpack.c.bf16 %v1041, %v1040
        %v1056 = vpack.c.bf16 %v1043, %v1042
        %v1057 = vpack.c.bf16 %v1045, %v1044
        %v1058 = vpack.c.bf16 %v1047, %v1046
        %v1059 = vpack.c.bf16 %v1049, %v1048
        %v1060 = vpack.c.bf16 %v1051, %v1050
        %v1061 = vpack.c.bf16 %v1053, %v1052
        %1062 = vmatprep.subr.bf16.mxu0 0
        %1063 = vmatpush1.bf16.msra.mxu0 %v756
        %1064 = vmatprep.subr.bf16.mxu0 0
        %1065 = vmatpush1.bf16.msra.mxu0 %v757
        %1066 = vmatprep.subr.bf16.mxu0 0
        %1067 = vmatpush1.bf16.msra.mxu0 %v758
        %1068 = vmatprep.subr.bf16.mxu0 0
        %1069 = vmatpush1.bf16.msra.mxu0 %v759
        %1070 = vmatprep.subr.bf16.mxu0 0
        %1071 = vmatpush1.bf16.msra.mxu0 %v760
        %1072 = vmatprep.subr.bf16.mxu0 0
        %1073 = vmatpush1.bf16.msra.mxu0 %v761
        %1074 = vmatprep.subr.bf16.mxu0 0
        %1075 = vmatpush1.bf16.msra.mxu0 %v762
        %1076 = vmatprep.subr.bf16.mxu0 0
        %1077 = vmatpush1.bf16.msra.mxu0 %v763
        %1078 = vmatprep.subr.bf16.mxu0 0
        %1079 = vmatpush1.bf16.msra.mxu0 0
        %1080 = vmatprep.subr.bf16.mxu0 0
        %1081 = vmatpush1.bf16.msra.mxu0 0
        %1082 = vmatprep.subr.bf16.mxu0 0
        %1083 = vmatpush1.bf16.msra.mxu0 0
        %1084 = vmatprep.subr.bf16.mxu0 0
        %1085 = vmatpush1.bf16.msra.mxu0 0
        %1086 = vmatprep.subr.bf16.mxu0 0
        %1087 = vmatpush1.bf16.msra.mxu0 0
        %1088 = vmatprep.subr.bf16.mxu0 0
        %1089 = vmatpush1.bf16.msra.mxu0 0
        %1090 = vmatprep.subr.bf16.mxu0 0
        %1091 = vmatpush1.bf16.msra.mxu0 0
        %1092 = vmatprep.subr.bf16.mxu0 0
        %1093 = vmatpush1.bf16.msra.mxu0 0
        %1094 = vmatprep.mubr.bf16.mxu0 0
        %1095 = vmatmul.mubr.bf16.gmra.mrb[0].mxu0 %v1054
        %v1096 = vpop.f32.mrb[0].mxu0
        %v1097 = vadd.f32 0.0, %v1096
        %v1098 = vpop.f32.mrb[0].mxu0
        %v1099 = vpop.f32.mrb[0].mxu0
        %v1100 = vadd.f32 0.0, %v1099
        %v1101 = vpop.f32.mrb[0].mxu0
        %1102 = vmatprep.mubr.bf16.mxu0 0
        %1103 = vmatmul.mubr.bf16.gmra.mrb[0].mxu0 %v1055
        %v1104 = vpop.f32.mrb[0].mxu0
        %v1105 = vadd.f32 0.0, %v1104
        %v1106 = vpop.f32.mrb[0].mxu0
        %v1107 = vpop.f32.mrb[0].mxu0
        %v1108 = vadd.f32 0.0, %v1107
        %v1109 = vpop.f32.mrb[0].mxu0
        %1110 = vmatprep.mubr.bf16.mxu0 0
        %1111 = vmatmul.mubr.bf16.gmra.mrb[0].mxu0 %v1056
        %v1112 = vpop.f32.mrb[0].mxu0
        %v1113 = vadd.f32 0.0, %v1112
        %v1114 = vpop.f32.mrb[0].mxu0
        %v1115 = vpop.f32.mrb[0].mxu0
        %v1116 = vadd.f32 0.0, %v1115
        %v1117 = vpop.f32.mrb[0].mxu0
        %1118 = vmatprep.mubr.bf16.mxu0 0
        %1119 = vmatmul.mubr.bf16.gmra.mrb[0].mxu0 %v1057
        %v1120 = vpop.f32.mrb[0].mxu0
        %v1121 = vadd.f32 0.0, %v1120
        %v1122 = vpop.f32.mrb[0].mxu0
        %v1123 = vpop.f32.mrb[0].mxu0
        %v1124 = vadd.f32 0.0, %v1123
        %v1125 = vpop.f32.mrb[0].mxu0
        %1126 = vmatprep.mubr.bf16.mxu0 0
        %1127 = vmatmul.mubr.bf16.gmra.mrb[0].mxu0 %v1058
        %v1128 = vpop.f32.mrb[0].mxu0
        %v1129 = vadd.f32 0.0, %v1128
        %v1130 = vpop.f32.mrb[0].mxu0
        %v1131 = vpop.f32.mrb[0].mxu0
        %v1132 = vadd.f32 0.0, %v1131
        %v1133 = vpop.f32.mrb[0].mxu0
        %1134 = vmatprep.mubr.bf16.mxu0 0
        %1135 = vmatmul.mubr.bf16.gmra.mrb[0].mxu0 %v1059
        %v1136 = vpop.f32.mrb[0].mxu0
        %v1137 = vadd.f32 0.0, %v1136
        %v1138 = vpop.f32.mrb[0].mxu0
        %v1139 = vpop.f32.mrb[0].mxu0
        %v1140 = vadd.f32 0.0, %v1139
        %v1141 = vpop.f32.mrb[0].mxu0
        %1142 = vmatprep.mubr.bf16.mxu0 0
        %1143 = vmatmul.mubr.bf16.gmra.mrb[0].mxu0 %v1060
        %v1144 = vpop.f32.mrb[0].mxu0
        %v1145 = vadd.f32 0.0, %v1144
        %v1146 = vpop.f32.mrb[0].mxu0
        %v1147 = vpop.f32.mrb[0].mxu0
        %v1148 = vadd.f32 0.0, %v1147
        %v1149 = vpop.f32.mrb[0].mxu0
        %1150 = vmatprep.mubr.bf16.mxu0 0
        %1151 = vmatmul.mubr.bf16.gmra.mrb[0].mxu0 %v1061
        %v1152 = vpop.f32.mrb[0].mxu0
        %v1153 = vadd.f32 0.0, %v1152
        %v1154 = vpop.f32.mrb[0].mxu0
        %v1155 = vpop.f32.mrb[0].mxu0
        %v1156 = vadd.f32 0.0, %v1155
        %v1157 = vpop.f32.mrb[0].mxu0
        %1158 = vdwg.mxu0
        %1167 = vrot.lane.b32.xlu0 %v740, 96
        %v1168 = vpop.permute.xlu0 %1167
        %1169 = vrot.lane.b32.xlu0 %v741, 96
        %v1170 = vpop.permute.xlu0 %1169
        %1171 = vrot.lane.b32.xlu0 %v742, 96
        %v1172 = vpop.permute.xlu0 %1171
        %1173 = vrot.lane.b32.xlu0 %v743, 96
        %v1174 = vpop.permute.xlu0 %1173
        %1175 = vrot.lane.b32.xlu0 %v744, 96
        %v1176 = vpop.permute.xlu0 %1175
        %1177 = vrot.lane.b32.xlu0 %v745, 96
        %v1178 = vpop.permute.xlu0 %1177
        %1179 = vrot.lane.b32.xlu0 %v746, 96
        %v1180 = vpop.permute.xlu0 %1179
        %1181 = vrot.lane.b32.xlu0 %v747, 96
        %v1182 = vpop.permute.xlu0 %1181
        %1191 = vrot.lane.b32.xlu0 %v748, 96
        %v1192 = vpop.permute.xlu0 %1191
        %1193 = vrot.lane.b32.xlu0 %v749, 96
        %v1194 = vpop.permute.xlu0 %1193
        %1195 = vrot.lane.b32.xlu0 %v750, 96
        %v1196 = vpop.permute.xlu0 %1195
        %1197 = vrot.lane.b32.xlu0 %v751, 96
        %v1198 = vpop.permute.xlu0 %1197
        %1199 = vrot.lane.b32.xlu0 %v752, 96
        %v1200 = vpop.permute.xlu0 %1199
        %1201 = vrot.lane.b32.xlu0 %v753, 96
        %v1202 = vpop.permute.xlu0 %1201
        %1203 = vrot.lane.b32.xlu0 %v754, 96
        %v1204 = vpop.permute.xlu0 %1203
        %1205 = vrot.lane.b32.xlu0 %v755, 96
        %v1206 = vpop.permute.xlu0 %1205
        %v1208 = vsel %vm764, %v1168, 0
        %v1211 = vsel %vm764, %v1170, 0
        %v1214 = vsel %vm764, %v1172, 0
        %v1217 = vsel %vm764, %v1174, 0
        %v1220 = vsel %vm764, %v1176, 0
        %v1223 = vsel %vm764, %v1178, 0
        %v1226 = vsel %vm764, %v1180, 0
        %v1229 = vsel %vm764, %v1182, 0
        %v1232 = vsel %vm764, %v1192, 0
        %v1235 = vsel %vm764, %v1194, 0
        %v1238 = vsel %vm764, %v1196, 0
        %v1241 = vsel %vm764, %v1198, 0
        %v1244 = vsel %vm764, %v1200, 0
        %v1247 = vsel %vm764, %v1202, 0
        %v1250 = vsel %vm764, %v1204, 0
        %v1253 = vsel %vm764, %v1206, 0
        %1255 = vmatprep.subr.bf16.mxu0 0
        %1256 = vmatpush1.bf16.xpose.msra.mxu0 %v1232
        %1257 = vmatprep.subr.bf16.mxu0 0
        %1258 = vmatpush1.bf16.xpose.msra.mxu0 %v1235
        %1259 = vmatprep.subr.bf16.mxu0 0
        %1260 = vmatpush1.bf16.xpose.msra.mxu0 %v1238
        %1261 = vmatprep.subr.bf16.mxu0 0
        %1262 = vmatpush1.bf16.xpose.msra.mxu0 %v1241
        %1263 = vmatprep.subr.bf16.mxu0 0
        %1264 = vmatpush1.bf16.xpose.msra.mxu0 %v1244
        %1265 = vmatprep.subr.bf16.mxu0 0
        %1266 = vmatpush1.bf16.xpose.msra.mxu0 %v1247
        %1267 = vmatprep.subr.bf16.mxu0 0
        %1268 = vmatpush1.bf16.xpose.msra.mxu0 %v1250
        %1269 = vmatprep.subr.bf16.mxu0 0
        %1270 = vmatpush1.bf16.xpose.msra.mxu0 %v1253
        %1271 = vmatprep.subr.bf16.mxu0 0
        %1272 = vmatpush1.bf16.xpose.msra.mxu0 0
        %1273 = vmatprep.subr.bf16.mxu0 0
        %1274 = vmatpush1.bf16.xpose.msra.mxu0 0
        %1275 = vmatprep.subr.bf16.mxu0 0
        %1276 = vmatpush1.bf16.xpose.msra.mxu0 0
        %1277 = vmatprep.subr.bf16.mxu0 0
        %1278 = vmatpush1.bf16.xpose.msra.mxu0 0
        %1279 = vmatprep.subr.bf16.mxu0 0
        %1280 = vmatpush1.bf16.xpose.msra.mxu0 0
        %1281 = vmatprep.subr.bf16.mxu0 0
        %1282 = vmatpush1.bf16.xpose.msra.mxu0 0
        %1283 = vmatprep.subr.bf16.mxu0 0
        %1284 = vmatpush1.bf16.xpose.msra.mxu0 0
        %1285 = vmatprep.subr.bf16.mxu0 0
        %1286 = vmatpush1.bf16.xpose.msra.mxu0 0
        %1287 = vmatprep.mubr.bf16.mxu0 0
        %1288 = vmatmul.mubr.bf16.gmra.mrb[0].mxu0 %v1208
        %v1289 = vpop.f32.mrb[0].mxu0
        %v1290 = vadd.f32 0.0, %v1289
        %v1291 = vpop.f32.mrb[0].mxu0
        %v1292 = vpop.f32.mrb[0].mxu0
        %v1293 = vadd.f32 0.0, %v1292
        %v1294 = vpop.f32.mrb[0].mxu0
        %1295 = vmatprep.mubr.bf16.mxu0 0
        %1296 = vmatmul.mubr.bf16.gmra.mrb[0].mxu0 %v1211
        %v1297 = vpop.f32.mrb[0].mxu0
        %v1298 = vadd.f32 0.0, %v1297
        %v1299 = vpop.f32.mrb[0].mxu0
        %v1300 = vpop.f32.mrb[0].mxu0
        %v1301 = vadd.f32 0.0, %v1300
        %v1302 = vpop.f32.mrb[0].mxu0
        %1303 = vmatprep.mubr.bf16.mxu0 0
        %1304 = vmatmul.mubr.bf16.gmra.mrb[0].mxu0 %v1214
        %v1305 = vpop.f32.mrb[0].mxu0
        %v1306 = vadd.f32 0.0, %v1305
        %v1307 = vpop.f32.mrb[0].mxu0
        %v1308 = vpop.f32.mrb[0].mxu0
        %v1309 = vadd.f32 0.0, %v1308
        %v1310 = vpop.f32.mrb[0].mxu0
        %1311 = vmatprep.mubr.bf16.mxu0 0
        %1312 = vmatmul.mubr.bf16.gmra.mrb[0].mxu0 %v1217
        %v1313 = vpop.f32.mrb[0].mxu0
        %v1314 = vadd.f32 0.0, %v1313
        %v1315 = vpop.f32.mrb[0].mxu0
        %v1316 = vpop.f32.mrb[0].mxu0
        %v1317 = vadd.f32 0.0, %v1316
        %v1318 = vpop.f32.mrb[0].mxu0
        %1319 = vmatprep.mubr.bf16.mxu0 0
        %1320 = vmatmul.mubr.bf16.gmra.mrb[0].mxu0 %v1220
        %v1321 = vpop.f32.mrb[0].mxu0
        %v1322 = vadd.f32 0.0, %v1321
        %v1323 = vpop.f32.mrb[0].mxu0
        %v1324 = vpop.f32.mrb[0].mxu0
        %v1325 = vadd.f32 0.0, %v1324
        %v1326 = vpop.f32.mrb[0].mxu0
        %1327 = vmatprep.mubr.bf16.mxu0 0
        %1328 = vmatmul.mubr.bf16.gmra.mrb[0].mxu0 %v1223
        %v1329 = vpop.f32.mrb[0].mxu0
        %v1330 = vadd.f32 0.0, %v1329
        %v1331 = vpop.f32.mrb[0].mxu0
        %v1332 = vpop.f32.mrb[0].mxu0
        %v1333 = vadd.f32 0.0, %v1332
        %v1334 = vpop.f32.mrb[0].mxu0
        %1335 = vmatprep.mubr.bf16.mxu0 0
        %1336 = vmatmul.mubr.bf16.gmra.mrb[0].mxu0 %v1226
        %v1337 = vpop.f32.mrb[0].mxu0
        %v1338 = vadd.f32 0.0, %v1337
        %v1339 = vpop.f32.mrb[0].mxu0
        %v1340 = vpop.f32.mrb[0].mxu0
        %v1341 = vadd.f32 0.0, %v1340
        %v1342 = vpop.f32.mrb[0].mxu0
        %1343 = vmatprep.mubr.bf16.mxu0 0
        %1344 = vmatmul.mubr.bf16.gmra.mrb[0].mxu0 %v1229
        %v1345 = vpop.f32.mrb[0].mxu0
        %v1346 = vadd.f32 0.0, %v1345
        %v1347 = vpop.f32.mrb[0].mxu0
        %v1348 = vpop.f32.mrb[0].mxu0
        %v1349 = vadd.f32 0.0, %v1348
        %v1350 = vpop.f32.mrb[0].mxu0
        %1351 = vdwg.mxu0
        %1352 = vmax.xlane.f32.xlu0 %v1290
        %v1353 = vpop.xlane.xlu0 %1352
        %1354 = vmax.xlane.f32.xlu0 %v1293
        %v1355 = vpop.xlane.xlu0 %1354
        %1356 = vmax.xlane.f32.xlu0 %v1298
        %v1357 = vpop.xlane.xlu0 %1356
        %1358 = vmax.xlane.f32.xlu0 %v1301
        %v1359 = vpop.xlane.xlu0 %1358
        %1360 = vmax.xlane.f32.xlu0 %v1306
        %v1361 = vpop.xlane.xlu0 %1360
        %1362 = vmax.xlane.f32.xlu0 %v1309
        %v1363 = vpop.xlane.xlu0 %1362
        %1364 = vmax.xlane.f32.xlu0 %v1314
        %v1365 = vpop.xlane.xlu0 %1364
        %1366 = vmax.xlane.f32.xlu0 %v1317
        %v1367 = vpop.xlane.xlu0 %1366
        %1368 = vmax.xlane.f32.xlu0 %v1322
        %v1369 = vpop.xlane.xlu0 %1368
        %1370 = vmax.xlane.f32.xlu0 %v1325
        %v1371 = vpop.xlane.xlu0 %1370
        %1372 = vmax.xlane.f32.xlu0 %v1330
        %v1373 = vpop.xlane.xlu0 %1372
        %1374 = vmax.xlane.f32.xlu0 %v1333
        %v1375 = vpop.xlane.xlu0 %1374
        %1376 = vmax.xlane.f32.xlu0 %v1338
        %v1377 = vpop.xlane.xlu0 %1376
        %1378 = vmax.xlane.f32.xlu0 %v1341
        %v1379 = vpop.xlane.xlu0 %1378
        %1380 = vmax.xlane.f32.xlu0 %v1346
        %v1381 = vpop.xlane.xlu0 %1380
        %1382 = vmax.xlane.f32.xlu0 %v1349
        %v1383 = vpop.xlane.xlu0 %1382
        %v1384 = vsub.f32 %v1290, %v1353
        %v1385 = vsub.f32 %v1293, %v1355
        %v1386 = vsub.f32 %v1298, %v1357
        %v1387 = vsub.f32 %v1301, %v1359
        %v1388 = vsub.f32 %v1306, %v1361
        %v1389 = vsub.f32 %v1309, %v1363
        %v1390 = vsub.f32 %v1314, %v1365
        %v1391 = vsub.f32 %v1317, %v1367
        %v1392 = vsub.f32 %v1322, %v1369
        %v1393 = vsub.f32 %v1325, %v1371
        %v1394 = vsub.f32 %v1330, %v1373
        %v1395 = vsub.f32 %v1333, %v1375
        %v1396 = vsub.f32 %v1338, %v1377
        %v1397 = vsub.f32 %v1341, %v1379
        %v1398 = vsub.f32 %v1346, %v1381
        %v1399 = vsub.f32 %v1349, %v1383
        %v1400 = vmul.f32 %v1384, 1.442695
        %v1401 = vpow.pop %v1400
        %v1402 = vmul.f32 %v1385, 1.442695
        %v1403 = vpow.pop %v1402
        %v1404 = vmul.f32 %v1386, 1.442695
        %v1405 = vpow.pop %v1404
        %v1406 = vmul.f32 %v1387, 1.442695
        %v1407 = vpow.pop %v1406
        %v1408 = vmul.f32 %v1388, 1.442695
        %v1409 = vpow.pop %v1408
        %v1410 = vmul.f32 %v1389, 1.442695
        %v1411 = vpow.pop %v1410
        %v1412 = vmul.f32 %v1390, 1.442695
        %v1413 = vpow.pop %v1412
        %v1414 = vmul.f32 %v1391, 1.442695
        %v1415 = vpow.pop %v1414
        %v1416 = vmul.f32 %v1392, 1.442695
        %v1417 = vpow.pop %v1416
        %v1418 = vmul.f32 %v1393, 1.442695
        %v1419 = vpow.pop %v1418
        %v1420 = vmul.f32 %v1394, 1.442695
        %v1421 = vpow.pop %v1420
        %v1422 = vmul.f32 %v1395, 1.442695
        %v1423 = vpow.pop %v1422
        %v1424 = vmul.f32 %v1396, 1.442695
        %v1425 = vpow.pop %v1424
        %v1426 = vmul.f32 %v1397, 1.442695
        %v1427 = vpow.pop %v1426
        %v1428 = vmul.f32 %v1398, 1.442695
        %v1429 = vpow.pop %v1428
        %v1430 = vmul.f32 %v1399, 1.442695
        %v1431 = vpow.pop %v1430
        %1432 = vadd.xlane.f32.xlu0 %v1401
        %v1433 = vpop.xlane.xlu0 %1432
        %1434 = vadd.xlane.f32.xlu0 %v1403
        %v1435 = vpop.xlane.xlu0 %1434
        %1436 = vadd.xlane.f32.xlu0 %v1405
        %v1437 = vpop.xlane.xlu0 %1436
        %1438 = vadd.xlane.f32.xlu0 %v1407
        %v1439 = vpop.xlane.xlu0 %1438
        %1440 = vadd.xlane.f32.xlu0 %v1409
        %v1441 = vpop.xlane.xlu0 %1440
        %1442 = vadd.xlane.f32.xlu0 %v1411
        %v1443 = vpop.xlane.xlu0 %1442
        %1444 = vadd.xlane.f32.xlu0 %v1413
        %v1445 = vpop.xlane.xlu0 %1444
        %1446 = vadd.xlane.f32.xlu0 %v1415
        %v1447 = vpop.xlane.xlu0 %1446
        %1448 = vadd.xlane.f32.xlu0 %v1417
        %v1449 = vpop.xlane.xlu0 %1448
        %1450 = vadd.xlane.f32.xlu0 %v1419
        %v1451 = vpop.xlane.xlu0 %1450
        %1452 = vadd.xlane.f32.xlu0 %v1421
        %v1453 = vpop.xlane.xlu0 %1452
        %1454 = vadd.xlane.f32.xlu0 %v1423
        %v1455 = vpop.xlane.xlu0 %1454
        %1456 = vadd.xlane.f32.xlu0 %v1425
        %v1457 = vpop.xlane.xlu0 %1456
        %1458 = vadd.xlane.f32.xlu0 %v1427
        %v1459 = vpop.xlane.xlu0 %1458
        %1460 = vadd.xlane.f32.xlu0 %v1429
        %v1461 = vpop.xlane.xlu0 %1460
        %1462 = vadd.xlane.f32.xlu0 %v1431
        %v1463 = vpop.xlane.xlu0 %1462
        %v1464 = vrcp.pop %v1433
        %v1465 = vrcp.pop %v1435
        %v1466 = vrcp.pop %v1437
        %v1467 = vrcp.pop %v1439
        %v1468 = vrcp.pop %v1441
        %v1469 = vrcp.pop %v1443
        %v1470 = vrcp.pop %v1445
        %v1471 = vrcp.pop %v1447
        %v1472 = vrcp.pop %v1449
        %v1473 = vrcp.pop %v1451
        %v1474 = vrcp.pop %v1453
        %v1475 = vrcp.pop %v1455
        %v1476 = vrcp.pop %v1457
        %v1477 = vrcp.pop %v1459
        %v1478 = vrcp.pop %v1461
        %v1479 = vrcp.pop %v1463
        %v1480 = vmul.f32 %v1401, %v1464
        %v1481 = vmul.f32 %v1403, %v1465
        %v1482 = vmul.f32 %v1405, %v1466
        %v1483 = vmul.f32 %v1407, %v1467
        %v1484 = vmul.f32 %v1409, %v1468
        %v1485 = vmul.f32 %v1411, %v1469
        %v1486 = vmul.f32 %v1413, %v1470
        %v1487 = vmul.f32 %v1415, %v1471
        %v1488 = vmul.f32 %v1417, %v1472
        %v1489 = vmul.f32 %v1419, %v1473
        %v1490 = vmul.f32 %v1421, %v1474
        %v1491 = vmul.f32 %v1423, %v1475
        %v1492 = vmul.f32 %v1425, %v1476
        %v1493 = vmul.f32 %v1427, %v1477
        %v1494 = vmul.f32 %v1429, %v1478
        %v1495 = vmul.f32 %v1431, %v1479
        %v1496 = vpack.c.bf16 %v1481, %v1480
        %v1497 = vpack.c.bf16 %v1483, %v1482
        %v1498 = vpack.c.bf16 %v1485, %v1484
        %v1499 = vpack.c.bf16 %v1487, %v1486
        %v1500 = vpack.c.bf16 %v1489, %v1488
        %v1501 = vpack.c.bf16 %v1491, %v1490
        %v1502 = vpack.c.bf16 %v1493, %v1492
        %v1503 = vpack.c.bf16 %v1495, %v1494
        %1512 = vrot.lane.b32.xlu0 %v756, 96
        %v1513 = vpop.permute.xlu0 %1512
        %1514 = vrot.lane.b32.xlu0 %v757, 96
        %v1515 = vpop.permute.xlu0 %1514
        %1516 = vrot.lane.b32.xlu0 %v758, 96
        %v1517 = vpop.permute.xlu0 %1516
        %1518 = vrot.lane.b32.xlu0 %v759, 96
        %v1519 = vpop.permute.xlu0 %1518
        %1520 = vrot.lane.b32.xlu0 %v760, 96
        %v1521 = vpop.permute.xlu0 %1520
        %1522 = vrot.lane.b32.xlu0 %v761, 96
        %v1523 = vpop.permute.xlu0 %1522
        %1524 = vrot.lane.b32.xlu0 %v762, 96
        %v1525 = vpop.permute.xlu0 %1524
        %1526 = vrot.lane.b32.xlu0 %v763, 96
        %v1527 = vpop.permute.xlu0 %1526
        %1536 = vmatprep.subr.bf16.mxu0 0
        %1537 = vmatpush1.bf16.msra.mxu0 %v1513
        %1538 = vmatprep.subr.bf16.mxu0 0
        %1539 = vmatpush1.bf16.msra.mxu0 %v1515
        %1540 = vmatprep.subr.bf16.mxu0 0
        %1541 = vmatpush1.bf16.msra.mxu0 %v1517
        %1542 = vmatprep.subr.bf16.mxu0 0
        %1543 = vmatpush1.bf16.msra.mxu0 %v1519
        %1544 = vmatprep.subr.bf16.mxu0 0
        %1545 = vmatpush1.bf16.msra.mxu0 %v1521
        %1546 = vmatprep.subr.bf16.mxu0 0
        %1547 = vmatpush1.bf16.msra.mxu0 %v1523
        %1548 = vmatprep.subr.bf16.mxu0 0
        %1549 = vmatpush1.bf16.msra.mxu0 %v1525
        %1550 = vmatprep.subr.bf16.mxu0 0
        %1551 = vmatpush1.bf16.msra.mxu0 %v1527
        %1552 = vmatprep.subr.bf16.mxu0 0
        %1553 = vmatpush1.bf16.msra.mxu0 0
        %1554 = vmatprep.subr.bf16.mxu0 0
        %1555 = vmatpush1.bf16.msra.mxu0 0
        %1556 = vmatprep.subr.bf16.mxu0 0
        %1557 = vmatpush1.bf16.msra.mxu0 0
        %1558 = vmatprep.subr.bf16.mxu0 0
        %1559 = vmatpush1.bf16.msra.mxu0 0
        %1560 = vmatprep.subr.bf16.mxu0 0
        %1561 = vmatpush1.bf16.msra.mxu0 0
        %1562 = vmatprep.subr.bf16.mxu0 0
        %1563 = vmatpush1.bf16.msra.mxu0 0
        %1564 = vmatprep.subr.bf16.mxu0 0
        %1565 = vmatpush1.bf16.msra.mxu0 0
        %1566 = vmatprep.subr.bf16.mxu0 0
        %1567 = vmatpush1.bf16.msra.mxu0 0
        %1568 = vmatprep.mubr.bf16.mxu0 0
        %1569 = vmatmul.mubr.bf16.gmra.mrb[0].mxu0 %v1496
        %v1570 = vpop.f32.mrb[0].mxu0
        %v1571 = vadd.f32 0.0, %v1570
        %v1572 = vpop.f32.mrb[0].mxu0
        %v1573 = vpop.f32.mrb[0].mxu0
        %v1574 = vadd.f32 0.0, %v1573
        %v1575 = vpop.f32.mrb[0].mxu0
        %1576 = vmatprep.mubr.bf16.mxu0 0
        %1577 = vmatmul.mubr.bf16.gmra.mrb[0].mxu0 %v1497
        %v1578 = vpop.f32.mrb[0].mxu0
        %v1579 = vadd.f32 0.0, %v1578
        %v1580 = vpop.f32.mrb[0].mxu0
        %v1581 = vpop.f32.mrb[0].mxu0
        %v1582 = vadd.f32 0.0, %v1581
        %v1583 = vpop.f32.mrb[0].mxu0
        %1584 = vmatprep.mubr.bf16.mxu0 0
        %1585 = vmatmul.mubr.bf16.gmra.mrb[0].mxu0 %v1498
        %v1586 = vpop.f32.mrb[0].mxu0
        %v1587 = vadd.f32 0.0, %v1586
        %v1588 = vpop.f32.mrb[0].mxu0
        %v1589 = vpop.f32.mrb[0].mxu0
        %v1590 = vadd.f32 0.0, %v1589
        %v1591 = vpop.f32.mrb[0].mxu0
        %1592 = vmatprep.mubr.bf16.mxu0 0
        %1593 = vmatmul.mubr.bf16.gmra.mrb[0].mxu0 %v1499
        %v1594 = vpop.f32.mrb[0].mxu0
        %v1595 = vadd.f32 0.0, %v1594
        %v1596 = vpop.f32.mrb[0].mxu0
        %v1597 = vpop.f32.mrb[0].mxu0
        %v1598 = vadd.f32 0.0, %v1597
        %v1599 = vpop.f32.mrb[0].mxu0
        %1600 = vmatprep.mubr.bf16.mxu0 0
        %1601 = vmatmul.mubr.bf16.gmra.mrb[0].mxu0 %v1500
        %v1602 = vpop.f32.mrb[0].mxu0
        %v1603 = vadd.f32 0.0, %v1602
        %v1604 = vpop.f32.mrb[0].mxu0
        %v1605 = vpop.f32.mrb[0].mxu0
        %v1606 = vadd.f32 0.0, %v1605
        %v1607 = vpop.f32.mrb[0].mxu0
        %1608 = vmatprep.mubr.bf16.mxu0 0
        %1609 = vmatmul.mubr.bf16.gmra.mrb[0].mxu0 %v1501
        %v1610 = vpop.f32.mrb[0].mxu0
        %v1611 = vadd.f32 0.0, %v1610
        %v1612 = vpop.f32.mrb[0].mxu0
        %v1613 = vpop.f32.mrb[0].mxu0
        %v1614 = vadd.f32 0.0, %v1613
        %v1615 = vpop.f32.mrb[0].mxu0
        %1616 = vmatprep.mubr.bf16.mxu0 0
        %1617 = vmatmul.mubr.bf16.gmra.mrb[0].mxu0 %v1502
        %v1618 = vpop.f32.mrb[0].mxu0
        %v1619 = vadd.f32 0.0, %v1618
        %v1620 = vpop.f32.mrb[0].mxu0
        %v1621 = vpop.f32.mrb[0].mxu0
        %v1622 = vadd.f32 0.0, %v1621
        %v1623 = vpop.f32.mrb[0].mxu0
        %1624 = vmatprep.mubr.bf16.mxu0 0
        %1625 = vmatmul.mubr.bf16.gmra.mrb[0].mxu0 %v1503
        %v1626 = vpop.f32.mrb[0].mxu0
        %v1627 = vadd.f32 0.0, %v1626
        %v1628 = vpop.f32.mrb[0].mxu0
        %v1629 = vpop.f32.mrb[0].mxu0
        %v1630 = vadd.f32 0.0, %v1629
        %v1631 = vpop.f32.mrb[0].mxu0
        %1632 = vdwg.mxu0
        %1633 = vrot.lane.b32.xlu0 %v740, 64
        %v1634 = vpop.permute.xlu0 %1633
        %1635 = vrot.lane.b32.xlu0 %v741, 64
        %v1636 = vpop.permute.xlu0 %1635
        %1637 = vrot.lane.b32.xlu0 %v742, 64
        %v1638 = vpop.permute.xlu0 %1637
        %1639 = vrot.lane.b32.xlu0 %v743, 64
        %v1640 = vpop.permute.xlu0 %1639
        %1641 = vrot.lane.b32.xlu0 %v744, 64
        %v1642 = vpop.permute.xlu0 %1641
        %1643 = vrot.lane.b32.xlu0 %v745, 64
        %v1644 = vpop.permute.xlu0 %1643
        %1645 = vrot.lane.b32.xlu0 %v746, 64
        %v1646 = vpop.permute.xlu0 %1645
        %1647 = vrot.lane.b32.xlu0 %v747, 64
        %v1648 = vpop.permute.xlu0 %1647
        %1649 = vrot.lane.b32.xlu0 %v748, 64
        %v1650 = vpop.permute.xlu0 %1649
        %1651 = vrot.lane.b32.xlu0 %v749, 64
        %v1652 = vpop.permute.xlu0 %1651
        %1653 = vrot.lane.b32.xlu0 %v750, 64
        %v1654 = vpop.permute.xlu0 %1653
        %1655 = vrot.lane.b32.xlu0 %v751, 64
        %v1656 = vpop.permute.xlu0 %1655
        %1657 = vrot.lane.b32.xlu0 %v752, 64
        %v1658 = vpop.permute.xlu0 %1657
        %1659 = vrot.lane.b32.xlu0 %v753, 64
        %v1660 = vpop.permute.xlu0 %1659
        %1661 = vrot.lane.b32.xlu0 %v754, 64
        %v1662 = vpop.permute.xlu0 %1661
        %1663 = vrot.lane.b32.xlu0 %v755, 64
        %v1664 = vpop.permute.xlu0 %1663
        %v1666 = vsel %vm764, %v1634, 0
        %v1669 = vsel %vm764, %v1636, 0
        %v1672 = vsel %vm764, %v1638, 0
        %v1675 = vsel %vm764, %v1640, 0
        %v1678 = vsel %vm764, %v1642, 0
        %v1681 = vsel %vm764, %v1644, 0
        %v1684 = vsel %vm764, %v1646, 0
        %v1687 = vsel %vm764, %v1648, 0
        %v1690 = vsel %vm764, %v1650, 0
        %v1693 = vsel %vm764, %v1652, 0
        %v1696 = vsel %vm764, %v1654, 0
        %v1699 = vsel %vm764, %v1656, 0
        %v1702 = vsel %vm764, %v1658, 0
        %v1705 = vsel %vm764, %v1660, 0
        %v1708 = vsel %vm764, %v1662, 0
        %v1711 = vsel %vm764, %v1664, 0
        %1713 = vmatprep.subr.bf16.mxu0 0
        %1714 = vmatpush1.bf16.xpose.msra.mxu0 %v1690
        %1715 = vmatprep.subr.bf16.mxu0 0
        %1716 = vmatpush1.bf16.xpose.msra.mxu0 %v1693
        %1717 = vmatprep.subr.bf16.mxu0 0
        %1718 = vmatpush1.bf16.xpose.msra.mxu0 %v1696
        %1719 = vmatprep.subr.bf16.mxu0 0
        %1720 = vmatpush1.bf16.xpose.msra.mxu0 %v1699
        %1721 = vmatprep.subr.bf16.mxu0 0
        %1722 = vmatpush1.bf16.xpose.msra.mxu0 %v1702
        %1723 = vmatprep.subr.bf16.mxu0 0
        %1724 = vmatpush1.bf16.xpose.msra.mxu0 %v1705
        %1725 = vmatprep.subr.bf16.mxu0 0
        %1726 = vmatpush1.bf16.xpose.msra.mxu0 %v1708
        %1727 = vmatprep.subr.bf16.mxu0 0
        %1728 = vmatpush1.bf16.xpose.msra.mxu0 %v1711
        %1729 = vmatprep.subr.bf16.mxu0 0
        %1730 = vmatpush1.bf16.xpose.msra.mxu0 0
        %1731 = vmatprep.subr.bf16.mxu0 0
        %1732 = vmatpush1.bf16.xpose.msra.mxu0 0
        %1733 = vmatprep.subr.bf16.mxu0 0
        %1734 = vmatpush1.bf16.xpose.msra.mxu0 0
        %1735 = vmatprep.subr.bf16.mxu0 0
        %1736 = vmatpush1.bf16.xpose.msra.mxu0 0
        %1737 = vmatprep.subr.bf16.mxu0 0
        %1738 = vmatpush1.bf16.xpose.msra.mxu0 0
        %1739 = vmatprep.subr.bf16.mxu0 0
        %1740 = vmatpush1.bf16.xpose.msra.mxu0 0
        %1741 = vmatprep.subr.bf16.mxu0 0
        %1742 = vmatpush1.bf16.xpose.msra.mxu0 0
        %1743 = vmatprep.subr.bf16.mxu0 0
        %1744 = vmatpush1.bf16.xpose.msra.mxu0 0
        %1745 = vmatprep.mubr.bf16.mxu0 0
        %1746 = vmatmul.mubr.bf16.gmra.mrb[0].mxu0 %v1666
        %v1747 = vpop.f32.mrb[0].mxu0
        %v1748 = vadd.f32 0.0, %v1747
        %v1749 = vpop.f32.mrb[0].mxu0
        %v1750 = vpop.f32.mrb[0].mxu0
        %v1751 = vadd.f32 0.0, %v1750
        %v1752 = vpop.f32.mrb[0].mxu0
        %1753 = vmatprep.mubr.bf16.mxu0 0
        %1754 = vmatmul.mubr.bf16.gmra.mrb[0].mxu0 %v1669
        %v1755 = vpop.f32.mrb[0].mxu0
        %v1756 = vadd.f32 0.0, %v1755
        %v1757 = vpop.f32.mrb[0].mxu0
        %v1758 = vpop.f32.mrb[0].mxu0
        %v1759 = vadd.f32 0.0, %v1758
        %v1760 = vpop.f32.mrb[0].mxu0
        %1761 = vmatprep.mubr.bf16.mxu0 0
        %1762 = vmatmul.mubr.bf16.gmra.mrb[0].mxu0 %v1672
        %v1763 = vpop.f32.mrb[0].mxu0
        %v1764 = vadd.f32 0.0, %v1763
        %v1765 = vpop.f32.mrb[0].mxu0
        %v1766 = vpop.f32.mrb[0].mxu0
        %v1767 = vadd.f32 0.0, %v1766
        %v1768 = vpop.f32.mrb[0].mxu0
        %1769 = vmatprep.mubr.bf16.mxu0 0
        %1770 = vmatmul.mubr.bf16.gmra.mrb[0].mxu0 %v1675
        %v1771 = vpop.f32.mrb[0].mxu0
        %v1772 = vadd.f32 0.0, %v1771
        %v1773 = vpop.f32.mrb[0].mxu0
        %v1774 = vpop.f32.mrb[0].mxu0
        %v1775 = vadd.f32 0.0, %v1774
        %v1776 = vpop.f32.mrb[0].mxu0
        %1777 = vmatprep.mubr.bf16.mxu0 0
        %1778 = vmatmul.mubr.bf16.gmra.mrb[0].mxu0 %v1678
        %v1779 = vpop.f32.mrb[0].mxu0
        %v1780 = vadd.f32 0.0, %v1779
        %v1781 = vpop.f32.mrb[0].mxu0
        %v1782 = vpop.f32.mrb[0].mxu0
        %v1783 = vadd.f32 0.0, %v1782
        %v1784 = vpop.f32.mrb[0].mxu0
        %1785 = vmatprep.mubr.bf16.mxu0 0
        %1786 = vmatmul.mubr.bf16.gmra.mrb[0].mxu0 %v1681
        %v1787 = vpop.f32.mrb[0].mxu0
        %v1788 = vadd.f32 0.0, %v1787
        %v1789 = vpop.f32.mrb[0].mxu0
        %v1790 = vpop.f32.mrb[0].mxu0
        %v1791 = vadd.f32 0.0, %v1790
        %v1792 = vpop.f32.mrb[0].mxu0
        %1793 = vmatprep.mubr.bf16.mxu0 0
        %1794 = vmatmul.mubr.bf16.gmra.mrb[0].mxu0 %v1684
        %v1795 = vpop.f32.mrb[0].mxu0
        %v1796 = vadd.f32 0.0, %v1795
        %v1797 = vpop.f32.mrb[0].mxu0
        %v1798 = vpop.f32.mrb[0].mxu0
        %v1799 = vadd.f32 0.0, %v1798
        %v1800 = vpop.f32.mrb[0].mxu0
        %1801 = vmatprep.mubr.bf16.mxu0 0
        %1802 = vmatmul.mubr.bf16.gmra.mrb[0].mxu0 %v1687
        %v1803 = vpop.f32.mrb[0].mxu0
        %v1804 = vadd.f32 0.0, %v1803
        %v1805 = vpop.f32.mrb[0].mxu0
        %v1806 = vpop.f32.mrb[0].mxu0
        %v1807 = vadd.f32 0.0, %v1806
        %v1808 = vpop.f32.mrb[0].mxu0
        %1809 = vdwg.mxu0
        %1810 = vmax.xlane.f32.xlu0 %v1748
        %v1811 = vpop.xlane.xlu0 %1810
        %1812 = vmax.xlane.f32.xlu0 %v1751
        %v1813 = vpop.xlane.xlu0 %1812
        %1814 = vmax.xlane.f32.xlu0 %v1756
        %v1815 = vpop.xlane.xlu0 %1814
        %1816 = vmax.xlane.f32.xlu0 %v1759
        %v1817 = vpop.xlane.xlu0 %1816
        %1818 = vmax.xlane.f32.xlu0 %v1764
        %v1819 = vpop.xlane.xlu0 %1818
        %1820 = vmax.xlane.f32.xlu0 %v1767
        %v1821 = vpop.xlane.xlu0 %1820
        %1822 = vmax.xlane.f32.xlu0 %v1772
        %v1823 = vpop.xlane.xlu0 %1822
        %1824 = vmax.xlane.f32.xlu0 %v1775
        %v1825 = vpop.xlane.xlu0 %1824
        %1826 = vmax.xlane.f32.xlu0 %v1780
        %v1827 = vpop.xlane.xlu0 %1826
        %1828 = vmax.xlane.f32.xlu0 %v1783
        %v1829 = vpop.xlane.xlu0 %1828
        %1830 = vmax.xlane.f32.xlu0 %v1788
        %v1831 = vpop.xlane.xlu0 %1830
        %1832 = vmax.xlane.f32.xlu0 %v1791
        %v1833 = vpop.xlane.xlu0 %1832
        %1834 = vmax.xlane.f32.xlu0 %v1796
        %v1835 = vpop.xlane.xlu0 %1834
        %1836 = vmax.xlane.f32.xlu0 %v1799
        %v1837 = vpop.xlane.xlu0 %1836
        %1838 = vmax.xlane.f32.xlu0 %v1804
        %v1839 = vpop.xlane.xlu0 %1838
        %1840 = vmax.xlane.f32.xlu0 %v1807
        %v1841 = vpop.xlane.xlu0 %1840
        %v1842 = vsub.f32 %v1748, %v1811
        %v1843 = vsub.f32 %v1751, %v1813
        %v1844 = vsub.f32 %v1756, %v1815
        %v1845 = vsub.f32 %v1759, %v1817
        %v1846 = vsub.f32 %v1764, %v1819
        %v1847 = vsub.f32 %v1767, %v1821
        %v1848 = vsub.f32 %v1772, %v1823
        %v1849 = vsub.f32 %v1775, %v1825
        %v1850 = vsub.f32 %v1780, %v1827
        %v1851 = vsub.f32 %v1783, %v1829
        %v1852 = vsub.f32 %v1788, %v1831
        %v1853 = vsub.f32 %v1791, %v1833
        %v1854 = vsub.f32 %v1796, %v1835
        %v1855 = vsub.f32 %v1799, %v1837
        %v1856 = vsub.f32 %v1804, %v1839
        %v1857 = vsub.f32 %v1807, %v1841
        %v1858 = vmul.f32 %v1842, 1.442695
        %v1859 = vpow.pop %v1858
        %v1860 = vmul.f32 %v1843, 1.442695
        %v1861 = vpow.pop %v1860
        %v1862 = vmul.f32 %v1844, 1.442695
        %v1863 = vpow.pop %v1862
        %v1864 = vmul.f32 %v1845, 1.442695
        %v1865 = vpow.pop %v1864
        %v1866 = vmul.f32 %v1846, 1.442695
        %v1867 = vpow.pop %v1866
        %v1868 = vmul.f32 %v1847, 1.442695
        %v1869 = vpow.pop %v1868
        %v1870 = vmul.f32 %v1848, 1.442695
        %v1871 = vpow.pop %v1870
        %v1872 = vmul.f32 %v1849, 1.442695
        %v1873 = vpow.pop %v1872
        %v1874 = vmul.f32 %v1850, 1.442695
        %v1875 = vpow.pop %v1874
        %v1876 = vmul.f32 %v1851, 1.442695
        %v1877 = vpow.pop %v1876
        %v1878 = vmul.f32 %v1852, 1.442695
        %v1879 = vpow.pop %v1878
        %v1880 = vmul.f32 %v1853, 1.442695
        %v1881 = vpow.pop %v1880
        %v1882 = vmul.f32 %v1854, 1.442695
        %v1883 = vpow.pop %v1882
        %v1884 = vmul.f32 %v1855, 1.442695
        %v1885 = vpow.pop %v1884
        %v1886 = vmul.f32 %v1856, 1.442695
        %v1887 = vpow.pop %v1886
        %v1888 = vmul.f32 %v1857, 1.442695
        %v1889 = vpow.pop %v1888
        %1890 = vadd.xlane.f32.xlu0 %v1859
        %v1891 = vpop.xlane.xlu0 %1890
        %1892 = vadd.xlane.f32.xlu0 %v1861
        %v1893 = vpop.xlane.xlu0 %1892
        %1894 = vadd.xlane.f32.xlu0 %v1863
        %v1895 = vpop.xlane.xlu0 %1894
        %1896 = vadd.xlane.f32.xlu0 %v1865
        %v1897 = vpop.xlane.xlu0 %1896
        %1898 = vadd.xlane.f32.xlu0 %v1867
        %v1899 = vpop.xlane.xlu0 %1898
        %1900 = vadd.xlane.f32.xlu0 %v1869
        %v1901 = vpop.xlane.xlu0 %1900
        %1902 = vadd.xlane.f32.xlu0 %v1871
        %v1903 = vpop.xlane.xlu0 %1902
        %1904 = vadd.xlane.f32.xlu0 %v1873
        %v1905 = vpop.xlane.xlu0 %1904
        %1906 = vadd.xlane.f32.xlu0 %v1875
        %v1907 = vpop.xlane.xlu0 %1906
        %1908 = vadd.xlane.f32.xlu0 %v1877
        %v1909 = vpop.xlane.xlu0 %1908
        %1910 = vadd.xlane.f32.xlu0 %v1879
        %v1911 = vpop.xlane.xlu0 %1910
        %1912 = vadd.xlane.f32.xlu0 %v1881
        %v1913 = vpop.xlane.xlu0 %1912
        %1914 = vadd.xlane.f32.xlu0 %v1883
        %v1915 = vpop.xlane.xlu0 %1914
        %1916 = vadd.xlane.f32.xlu0 %v1885
        %v1917 = vpop.xlane.xlu0 %1916
        %1918 = vadd.xlane.f32.xlu0 %v1887
        %v1919 = vpop.xlane.xlu0 %1918
        %1920 = vadd.xlane.f32.xlu0 %v1889
        %v1921 = vpop.xlane.xlu0 %1920
        %v1922 = vrcp.pop %v1891
        %v1923 = vrcp.pop %v1893
        %v1924 = vrcp.pop %v1895
        %v1925 = vrcp.pop %v1897
        %v1926 = vrcp.pop %v1899
        %v1927 = vrcp.pop %v1901
        %v1928 = vrcp.pop %v1903
        %v1929 = vrcp.pop %v1905
        %v1930 = vrcp.pop %v1907
        %v1931 = vrcp.pop %v1909
        %v1932 = vrcp.pop %v1911
        %v1933 = vrcp.pop %v1913
        %v1934 = vrcp.pop %v1915
        %v1935 = vrcp.pop %v1917
        %v1936 = vrcp.pop %v1919
        %v1937 = vrcp.pop %v1921
        %v1938 = vmul.f32 %v1859, %v1922
        %v1939 = vmul.f32 %v1861, %v1923
        %v1940 = vmul.f32 %v1863, %v1924
        %v1941 = vmul.f32 %v1865, %v1925
        %v1942 = vmul.f32 %v1867, %v1926
        %v1943 = vmul.f32 %v1869, %v1927
        %v1944 = vmul.f32 %v1871, %v1928
        %v1945 = vmul.f32 %v1873, %v1929
        %v1946 = vmul.f32 %v1875, %v1930
        %v1947 = vmul.f32 %v1877, %v1931
        %v1948 = vmul.f32 %v1879, %v1932
        %v1949 = vmul.f32 %v1881, %v1933
        %v1950 = vmul.f32 %v1883, %v1934
        %v1951 = vmul.f32 %v1885, %v1935
        %v1952 = vmul.f32 %v1887, %v1936
        %v1953 = vmul.f32 %v1889, %v1937
        %v1954 = vpack.c.bf16 %v1939, %v1938
        %v1955 = vpack.c.bf16 %v1941, %v1940
        %v1956 = vpack.c.bf16 %v1943, %v1942
        %v1957 = vpack.c.bf16 %v1945, %v1944
        %v1958 = vpack.c.bf16 %v1947, %v1946
        %v1959 = vpack.c.bf16 %v1949, %v1948
        %v1960 = vpack.c.bf16 %v1951, %v1950
        %v1961 = vpack.c.bf16 %v1953, %v1952
        %1962 = vrot.lane.b32.xlu0 %v756, 64
        %v1963 = vpop.permute.xlu0 %1962
        %1964 = vrot.lane.b32.xlu0 %v757, 64
        %v1965 = vpop.permute.xlu0 %1964
        %1966 = vrot.lane.b32.xlu0 %v758, 64
        %v1967 = vpop.permute.xlu0 %1966
        %1968 = vrot.lane.b32.xlu0 %v759, 64
        %v1969 = vpop.permute.xlu0 %1968
        %1970 = vrot.lane.b32.xlu0 %v760, 64
        %v1971 = vpop.permute.xlu0 %1970
        %1972 = vrot.lane.b32.xlu0 %v761, 64
        %v1973 = vpop.permute.xlu0 %1972
        %1974 = vrot.lane.b32.xlu0 %v762, 64
        %v1975 = vpop.permute.xlu0 %1974
        %1976 = vrot.lane.b32.xlu0 %v763, 64
        %v1977 = vpop.permute.xlu0 %1976
        %1986 = vmatprep.subr.bf16.mxu0 0
        %1987 = vmatpush1.bf16.msra.mxu0 %v1963
        %1988 = vmatprep.subr.bf16.mxu0 0
        %1989 = vmatpush1.bf16.msra.mxu0 %v1965
        %1990 = vmatprep.subr.bf16.mxu0 0
        %1991 = vmatpush1.bf16.msra.mxu0 %v1967
        %1992 = vmatprep.subr.bf16.mxu0 0
        %1993 = vmatpush1.bf16.msra.mxu0 %v1969
        %1994 = vmatprep.subr.bf16.mxu0 0
        %1995 = vmatpush1.bf16.msra.mxu0 %v1971
        %1996 = vmatprep.subr.bf16.mxu0 0
        %1997 = vmatpush1.bf16.msra.mxu0 %v1973
        %1998 = vmatprep.subr.bf16.mxu0 0
        %1999 = vmatpush1.bf16.msra.mxu0 %v1975
        %2000 = vmatprep.subr.bf16.mxu0 0
        %2001 = vmatpush1.bf16.msra.mxu0 %v1977
        %2002 = vmatprep.subr.bf16.mxu0 0
        %2003 = vmatpush1.bf16.msra.mxu0 0
        %2004 = vmatprep.subr.bf16.mxu0 0
        %2005 = vmatpush1.bf16.msra.mxu0 0
        %2006 = vmatprep.subr.bf16.mxu0 0
        %2007 = vmatpush1.bf16.msra.mxu0 0
        %2008 = vmatprep.subr.bf16.mxu0 0
        %2009 = vmatpush1.bf16.msra.mxu0 0
        %2010 = vmatprep.subr.bf16.mxu0 0
        %2011 = vmatpush1.bf16.msra.mxu0 0
        %2012 = vmatprep.subr.bf16.mxu0 0
        %2013 = vmatpush1.bf16.msra.mxu0 0
        %2014 = vmatprep.subr.bf16.mxu0 0
        %2015 = vmatpush1.bf16.msra.mxu0 0
        %2016 = vmatprep.subr.bf16.mxu0 0
        %2017 = vmatpush1.bf16.msra.mxu0 0
        %2018 = vmatprep.mubr.bf16.mxu0 0
        %2019 = vmatmul.mubr.bf16.gmra.mrb[0].mxu0 %v1954
        %v2020 = vpop.f32.mrb[0].mxu0
        %v2021 = vadd.f32 0.0, %v2020
        %v2022 = vpop.f32.mrb[0].mxu0
        %v2023 = vpop.f32.mrb[0].mxu0
        %v2024 = vadd.f32 0.0, %v2023
        %v2025 = vpop.f32.mrb[0].mxu0
        %2026 = vmatprep.mubr.bf16.mxu0 0
        %2027 = vmatmul.mubr.bf16.gmra.mrb[0].mxu0 %v1955
        %v2028 = vpop.f32.mrb[0].mxu0
        %v2029 = vadd.f32 0.0, %v2028
        %v2030 = vpop.f32.mrb[0].mxu0
        %v2031 = vpop.f32.mrb[0].mxu0
        %v2032 = vadd.f32 0.0, %v2031
        %v2033 = vpop.f32.mrb[0].mxu0
        %2034 = vmatprep.mubr.bf16.mxu0 0
        %2035 = vmatmul.mubr.bf16.gmra.mrb[0].mxu0 %v1956
        %v2036 = vpop.f32.mrb[0].mxu0
        %v2037 = vadd.f32 0.0, %v2036
        %v2038 = vpop.f32.mrb[0].mxu0
        %v2039 = vpop.f32.mrb[0].mxu0
        %v2040 = vadd.f32 0.0, %v2039
        %v2041 = vpop.f32.mrb[0].mxu0
        %2042 = vmatprep.mubr.bf16.mxu0 0
        %2043 = vmatmul.mubr.bf16.gmra.mrb[0].mxu0 %v1957
        %v2044 = vpop.f32.mrb[0].mxu0
        %v2045 = vadd.f32 0.0, %v2044
        %v2046 = vpop.f32.mrb[0].mxu0
        %v2047 = vpop.f32.mrb[0].mxu0
        %v2048 = vadd.f32 0.0, %v2047
        %v2049 = vpop.f32.mrb[0].mxu0
        %2050 = vmatprep.mubr.bf16.mxu0 0
        %2051 = vmatmul.mubr.bf16.gmra.mrb[0].mxu0 %v1958
        %v2052 = vpop.f32.mrb[0].mxu0
        %v2053 = vadd.f32 0.0, %v2052
        %v2054 = vpop.f32.mrb[0].mxu0
        %v2055 = vpop.f32.mrb[0].mxu0
        %v2056 = vadd.f32 0.0, %v2055
        %v2057 = vpop.f32.mrb[0].mxu0
        %2058 = vmatprep.mubr.bf16.mxu0 0
        %2059 = vmatmul.mubr.bf16.gmra.mrb[0].mxu0 %v1959
        %v2060 = vpop.f32.mrb[0].mxu0
        %v2061 = vadd.f32 0.0, %v2060
        %v2062 = vpop.f32.mrb[0].mxu0
        %v2063 = vpop.f32.mrb[0].mxu0
        %v2064 = vadd.f32 0.0, %v2063
        %v2065 = vpop.f32.mrb[0].mxu0
        %2066 = vmatprep.mubr.bf16.mxu0 0
        %2067 = vmatmul.mubr.bf16.gmra.mrb[0].mxu0 %v1960
        %v2068 = vpop.f32.mrb[0].mxu0
        %v2069 = vadd.f32 0.0, %v2068
        %v2070 = vpop.f32.mrb[0].mxu0
        %v2071 = vpop.f32.mrb[0].mxu0
        %v2072 = vadd.f32 0.0, %v2071
        %v2073 = vpop.f32.mrb[0].mxu0
        %2074 = vmatprep.mubr.bf16.mxu0 0
        %2075 = vmatmul.mubr.bf16.gmra.mrb[0].mxu0 %v1961
        %v2076 = vpop.f32.mrb[0].mxu0
        %v2077 = vadd.f32 0.0, %v2076
        %v2078 = vpop.f32.mrb[0].mxu0
        %v2079 = vpop.f32.mrb[0].mxu0
        %v2080 = vadd.f32 0.0, %v2079
        %v2081 = vpop.f32.mrb[0].mxu0
        %2082 = vdwg.mxu0
        %2083 = vrot.lane.b32.xlu0 %v740, 32
        %v2084 = vpop.permute.xlu0 %2083
        %2085 = vrot.lane.b32.xlu0 %v741, 32
        %v2086 = vpop.permute.xlu0 %2085
        %2087 = vrot.lane.b32.xlu0 %v742, 32
        %v2088 = vpop.permute.xlu0 %2087
        %2089 = vrot.lane.b32.xlu0 %v743, 32
        %v2090 = vpop.permute.xlu0 %2089
        %2091 = vrot.lane.b32.xlu0 %v744, 32
        %v2092 = vpop.permute.xlu0 %2091
        %2093 = vrot.lane.b32.xlu0 %v745, 32
        %v2094 = vpop.permute.xlu0 %2093
        %2095 = vrot.lane.b32.xlu0 %v746, 32
        %v2096 = vpop.permute.xlu0 %2095
        %2097 = vrot.lane.b32.xlu0 %v747, 32
        %v2098 = vpop.permute.xlu0 %2097
        %2099 = vrot.lane.b32.xlu0 %v748, 32
        %v2100 = vpop.permute.xlu0 %2099
        %2101 = vrot.lane.b32.xlu0 %v749, 32
        %v2102 = vpop.permute.xlu0 %2101
        %2103 = vrot.lane.b32.xlu0 %v750, 32
        %v2104 = vpop.permute.xlu0 %2103
        %2105 = vrot.lane.b32.xlu0 %v751, 32
        %v2106 = vpop.permute.xlu0 %2105
        %2107 = vrot.lane.b32.xlu0 %v752, 32
        %v2108 = vpop.permute.xlu0 %2107
        %2109 = vrot.lane.b32.xlu0 %v753, 32
        %v2110 = vpop.permute.xlu0 %2109
        %2111 = vrot.lane.b32.xlu0 %v754, 32
        %v2112 = vpop.permute.xlu0 %2111
        %2113 = vrot.lane.b32.xlu0 %v755, 32
        %v2114 = vpop.permute.xlu0 %2113
        %v2116 = vsel %vm764, %v2084, 0
        %v2119 = vsel %vm764, %v2086, 0
        %v2122 = vsel %vm764, %v2088, 0
        %v2125 = vsel %vm764, %v2090, 0
        %v2128 = vsel %vm764, %v2092, 0
        %v2131 = vsel %vm764, %v2094, 0
        %v2134 = vsel %vm764, %v2096, 0
        %v2137 = vsel %vm764, %v2098, 0
        %v2140 = vsel %vm764, %v2100, 0
        %v2143 = vsel %vm764, %v2102, 0
        %v2146 = vsel %vm764, %v2104, 0
        %v2149 = vsel %vm764, %v2106, 0
        %v2152 = vsel %vm764, %v2108, 0
        %v2155 = vsel %vm764, %v2110, 0
        %v2158 = vsel %vm764, %v2112, 0
        %v2161 = vsel %vm764, %v2114, 0
        %2163 = vmatprep.subr.bf16.mxu0 0
        %2164 = vmatpush1.bf16.xpose.msra.mxu0 %v2140
        %2165 = vmatprep.subr.bf16.mxu0 0
        %2166 = vmatpush1.bf16.xpose.msra.mxu0 %v2143
        %2167 = vmatprep.subr.bf16.mxu0 0
        %2168 = vmatpush1.bf16.xpose.msra.mxu0 %v2146
        %2169 = vmatprep.subr.bf16.mxu0 0
        %2170 = vmatpush1.bf16.xpose.msra.mxu0 %v2149
        %2171 = vmatprep.subr.bf16.mxu0 0
        %2172 = vmatpush1.bf16.xpose.msra.mxu0 %v2152
        %2173 = vmatprep.subr.bf16.mxu0 0
        %2174 = vmatpush1.bf16.xpose.msra.mxu0 %v2155
        %2175 = vmatprep.subr.bf16.mxu0 0
        %2176 = vmatpush1.bf16.xpose.msra.mxu0 %v2158
        %2177 = vmatprep.subr.bf16.mxu0 0
        %2178 = vmatpush1.bf16.xpose.msra.mxu0 %v2161
        %2179 = vmatprep.subr.bf16.mxu0 0
        %2180 = vmatpush1.bf16.xpose.msra.mxu0 0
        %2181 = vmatprep.subr.bf16.mxu0 0
        %2182 = vmatpush1.bf16.xpose.msra.mxu0 0
        %2183 = vmatprep.subr.bf16.mxu0 0
        %2184 = vmatpush1.bf16.xpose.msra.mxu0 0
        %2185 = vmatprep.subr.bf16.mxu0 0
        %2186 = vmatpush1.bf16.xpose.msra.mxu0 0
        %2187 = vmatprep.subr.bf16.mxu0 0
        %2188 = vmatpush1.bf16.xpose.msra.mxu0 0
        %2189 = vmatprep.subr.bf16.mxu0 0
        %2190 = vmatpush1.bf16.xpose.msra.mxu0 0
        %2191 = vmatprep.subr.bf16.mxu0 0
        %2192 = vmatpush1.bf16.xpose.msra.mxu0 0
        %2193 = vmatprep.subr.bf16.mxu0 0
        %2194 = vmatpush1.bf16.xpose.msra.mxu0 0
        %2195 = vmatprep.mubr.bf16.mxu0 0
        %2196 = vmatmul.mubr.bf16.gmra.mrb[0].mxu0 %v2116
        %v2197 = vpop.f32.mrb[0].mxu0
        %v2198 = vadd.f32 0.0, %v2197
        %v2199 = vpop.f32.mrb[0].mxu0
        %v2200 = vpop.f32.mrb[0].mxu0
        %v2201 = vadd.f32 0.0, %v2200
        %v2202 = vpop.f32.mrb[0].mxu0
        %2203 = vmatprep.mubr.bf16.mxu0 0
        %2204 = vmatmul.mubr.bf16.gmra.mrb[0].mxu0 %v2119
        %v2205 = vpop.f32.mrb[0].mxu0
        %v2206 = vadd.f32 0.0, %v2205
        %v2207 = vpop.f32.mrb[0].mxu0
        %v2208 = vpop.f32.mrb[0].mxu0
        %v2209 = vadd.f32 0.0, %v2208
        %v2210 = vpop.f32.mrb[0].mxu0
        %2211 = vmatprep.mubr.bf16.mxu0 0
        %2212 = vmatmul.mubr.bf16.gmra.mrb[0].mxu0 %v2122
        %v2213 = vpop.f32.mrb[0].mxu0
        %v2214 = vadd.f32 0.0, %v2213
        %v2215 = vpop.f32.mrb[0].mxu0
        %v2216 = vpop.f32.mrb[0].mxu0
        %v2217 = vadd.f32 0.0, %v2216
        %v2218 = vpop.f32.mrb[0].mxu0
        %2219 = vmatprep.mubr.bf16.mxu0 0
        %2220 = vmatmul.mubr.bf16.gmra.mrb[0].mxu0 %v2125
        %v2221 = vpop.f32.mrb[0].mxu0
        %v2222 = vadd.f32 0.0, %v2221
        %v2223 = vpop.f32.mrb[0].mxu0
        %v2224 = vpop.f32.mrb[0].mxu0
        %v2225 = vadd.f32 0.0, %v2224
        %v2226 = vpop.f32.mrb[0].mxu0
        %2227 = vmatprep.mubr.bf16.mxu0 0
        %2228 = vmatmul.mubr.bf16.gmra.mrb[0].mxu0 %v2128
        %v2229 = vpop.f32.mrb[0].mxu0
        %v2230 = vadd.f32 0.0, %v2229
        %v2231 = vpop.f32.mrb[0].mxu0
        %v2232 = vpop.f32.mrb[0].mxu0
        %v2233 = vadd.f32 0.0, %v2232
        %v2234 = vpop.f32.mrb[0].mxu0
        %2235 = vmatprep.mubr.bf16.mxu0 0
        %2236 = vmatmul.mubr.bf16.gmra.mrb[0].mxu0 %v2131
        %v2237 = vpop.f32.mrb[0].mxu0
        %v2238 = vadd.f32 0.0, %v2237
        %v2239 = vpop.f32.mrb[0].mxu0
        %v2240 = vpop.f32.mrb[0].mxu0
        %v2241 = vadd.f32 0.0, %v2240
        %v2242 = vpop.f32.mrb[0].mxu0
        %2243 = vmatprep.mubr.bf16.mxu0 0
        %2244 = vmatmul.mubr.bf16.gmra.mrb[0].mxu0 %v2134
        %v2245 = vpop.f32.mrb[0].mxu0
        %v2246 = vadd.f32 0.0, %v2245
        %v2247 = vpop.f32.mrb[0].mxu0
        %v2248 = vpop.f32.mrb[0].mxu0
        %v2249 = vadd.f32 0.0, %v2248
        %v2250 = vpop.f32.mrb[0].mxu0
        %2251 = vmatprep.mubr.bf16.mxu0 0
        %2252 = vmatmul.mubr.bf16.gmra.mrb[0].mxu0 %v2137
        %v2253 = vpop.f32.mrb[0].mxu0
        %v2254 = vadd.f32 0.0, %v2253
        %v2255 = vpop.f32.mrb[0].mxu0
        %v2256 = vpop.f32.mrb[0].mxu0
        %v2257 = vadd.f32 0.0, %v2256
        %v2258 = vpop.f32.mrb[0].mxu0
        %2259 = vdwg.mxu0
        %2260 = vmax.xlane.f32.xlu0 %v2198
        %v2261 = vpop.xlane.xlu0 %2260
        %2262 = vmax.xlane.f32.xlu0 %v2201
        %v2263 = vpop.xlane.xlu0 %2262
        %2264 = vmax.xlane.f32.xlu0 %v2206
        %v2265 = vpop.xlane.xlu0 %2264
        %2266 = vmax.xlane.f32.xlu0 %v2209
        %v2267 = vpop.xlane.xlu0 %2266
        %2268 = vmax.xlane.f32.xlu0 %v2214
        %v2269 = vpop.xlane.xlu0 %2268
        %2270 = vmax.xlane.f32.xlu0 %v2217
        %v2271 = vpop.xlane.xlu0 %2270
        %2272 = vmax.xlane.f32.xlu0 %v2222
        %v2273 = vpop.xlane.xlu0 %2272
        %2274 = vmax.xlane.f32.xlu0 %v2225
        %v2275 = vpop.xlane.xlu0 %2274
        %2276 = vmax.xlane.f32.xlu0 %v2230
        %v2277 = vpop.xlane.xlu0 %2276
        %2278 = vmax.xlane.f32.xlu0 %v2233
        %v2279 = vpop.xlane.xlu0 %2278
        %2280 = vmax.xlane.f32.xlu0 %v2238
        %v2281 = vpop.xlane.xlu0 %2280
        %2282 = vmax.xlane.f32.xlu0 %v2241
        %v2283 = vpop.xlane.xlu0 %2282
        %2284 = vmax.xlane.f32.xlu0 %v2246
        %v2285 = vpop.xlane.xlu0 %2284
        %2286 = vmax.xlane.f32.xlu0 %v2249
        %v2287 = vpop.xlane.xlu0 %2286
        %2288 = vmax.xlane.f32.xlu0 %v2254
        %v2289 = vpop.xlane.xlu0 %2288
        %2290 = vmax.xlane.f32.xlu0 %v2257
        %v2291 = vpop.xlane.xlu0 %2290
        %v2292 = vsub.f32 %v2198, %v2261
        %v2293 = vsub.f32 %v2201, %v2263
        %v2294 = vsub.f32 %v2206, %v2265
        %v2295 = vsub.f32 %v2209, %v2267
        %v2296 = vsub.f32 %v2214, %v2269
        %v2297 = vsub.f32 %v2217, %v2271
        %v2298 = vsub.f32 %v2222, %v2273
        %v2299 = vsub.f32 %v2225, %v2275
        %v2300 = vsub.f32 %v2230, %v2277
        %v2301 = vsub.f32 %v2233, %v2279
        %v2302 = vsub.f32 %v2238, %v2281
        %v2303 = vsub.f32 %v2241, %v2283
        %v2304 = vsub.f32 %v2246, %v2285
        %v2305 = vsub.f32 %v2249, %v2287
        %v2306 = vsub.f32 %v2254, %v2289
        %v2307 = vsub.f32 %v2257, %v2291
        %v2308 = vmul.f32 %v2292, 1.442695
        %v2309 = vpow.pop %v2308
        %v2310 = vmul.f32 %v2293, 1.442695
        %v2311 = vpow.pop %v2310
        %v2312 = vmul.f32 %v2294, 1.442695
        %v2313 = vpow.pop %v2312
        %v2314 = vmul.f32 %v2295, 1.442695
        %v2315 = vpow.pop %v2314
        %v2316 = vmul.f32 %v2296, 1.442695
        %v2317 = vpow.pop %v2316
        %v2318 = vmul.f32 %v2297, 1.442695
        %v2319 = vpow.pop %v2318
        %v2320 = vmul.f32 %v2298, 1.442695
        %v2321 = vpow.pop %v2320
        %v2322 = vmul.f32 %v2299, 1.442695
        %v2323 = vpow.pop %v2322
        %v2324 = vmul.f32 %v2300, 1.442695
        %v2325 = vpow.pop %v2324
        %v2326 = vmul.f32 %v2301, 1.442695
        %v2327 = vpow.pop %v2326
        %v2328 = vmul.f32 %v2302, 1.442695
        %v2329 = vpow.pop %v2328
        %v2330 = vmul.f32 %v2303, 1.442695
        %v2331 = vpow.pop %v2330
        %v2332 = vmul.f32 %v2304, 1.442695
        %v2333 = vpow.pop %v2332
        %v2334 = vmul.f32 %v2305, 1.442695
        %v2335 = vpow.pop %v2334
        %v2336 = vmul.f32 %v2306, 1.442695
        %v2337 = vpow.pop %v2336
        %v2338 = vmul.f32 %v2307, 1.442695
        %v2339 = vpow.pop %v2338
        %2340 = vadd.xlane.f32.xlu0 %v2309
        %v2341 = vpop.xlane.xlu0 %2340
        %2342 = vadd.xlane.f32.xlu0 %v2311
        %v2343 = vpop.xlane.xlu0 %2342
        %2344 = vadd.xlane.f32.xlu0 %v2313
        %v2345 = vpop.xlane.xlu0 %2344
        %2346 = vadd.xlane.f32.xlu0 %v2315
        %v2347 = vpop.xlane.xlu0 %2346
        %2348 = vadd.xlane.f32.xlu0 %v2317
        %v2349 = vpop.xlane.xlu0 %2348
        %2350 = vadd.xlane.f32.xlu0 %v2319
        %v2351 = vpop.xlane.xlu0 %2350
        %2352 = vadd.xlane.f32.xlu0 %v2321
        %v2353 = vpop.xlane.xlu0 %2352
        %2354 = vadd.xlane.f32.xlu0 %v2323
        %v2355 = vpop.xlane.xlu0 %2354
        %2356 = vadd.xlane.f32.xlu0 %v2325
        %v2357 = vpop.xlane.xlu0 %2356
        %2358 = vadd.xlane.f32.xlu0 %v2327
        %v2359 = vpop.xlane.xlu0 %2358
        %2360 = vadd.xlane.f32.xlu0 %v2329
        %v2361 = vpop.xlane.xlu0 %2360
        %2362 = vadd.xlane.f32.xlu0 %v2331
        %v2363 = vpop.xlane.xlu0 %2362
        %2364 = vadd.xlane.f32.xlu0 %v2333
        %v2365 = vpop.xlane.xlu0 %2364
        %2366 = vadd.xlane.f32.xlu0 %v2335
        %v2367 = vpop.xlane.xlu0 %2366
        %2368 = vadd.xlane.f32.xlu0 %v2337
        %v2369 = vpop.xlane.xlu0 %2368
        %2370 = vadd.xlane.f32.xlu0 %v2339
        %v2371 = vpop.xlane.xlu0 %2370
        %v2372 = vrcp.pop %v2341
        %v2373 = vrcp.pop %v2343
        %v2374 = vrcp.pop %v2345
        %v2375 = vrcp.pop %v2347
        %v2376 = vrcp.pop %v2349
        %v2377 = vrcp.pop %v2351
        %v2378 = vrcp.pop %v2353
        %v2379 = vrcp.pop %v2355
        %v2380 = vrcp.pop %v2357
        %v2381 = vrcp.pop %v2359
        %v2382 = vrcp.pop %v2361
        %v2383 = vrcp.pop %v2363
        %v2384 = vrcp.pop %v2365
        %v2385 = vrcp.pop %v2367
        %v2386 = vrcp.pop %v2369
        %v2387 = vrcp.pop %v2371
        %v2388 = vmul.f32 %v2309, %v2372
        %v2389 = vmul.f32 %v2311, %v2373
        %v2390 = vmul.f32 %v2313, %v2374
        %v2391 = vmul.f32 %v2315, %v2375
        %v2392 = vmul.f32 %v2317, %v2376
        %v2393 = vmul.f32 %v2319, %v2377
        %v2394 = vmul.f32 %v2321, %v2378
        %v2395 = vmul.f32 %v2323, %v2379
        %v2396 = vmul.f32 %v2325, %v2380
        %v2397 = vmul.f32 %v2327, %v2381
        %v2398 = vmul.f32 %v2329, %v2382
        %v2399 = vmul.f32 %v2331, %v2383
        %v2400 = vmul.f32 %v2333, %v2384
        %v2401 = vmul.f32 %v2335, %v2385
        %v2402 = vmul.f32 %v2337, %v2386
        %v2403 = vmul.f32 %v2339, %v2387
        %v2404 = vpack.c.bf16 %v2389, %v2388
        %v2405 = vpack.c.bf16 %v2391, %v2390
        %v2406 = vpack.c.bf16 %v2393, %v2392
        %v2407 = vpack.c.bf16 %v2395, %v2394
        %v2408 = vpack.c.bf16 %v2397, %v2396
        %v2409 = vpack.c.bf16 %v2399, %v2398
        %v2410 = vpack.c.bf16 %v2401, %v2400
        %v2411 = vpack.c.bf16 %v2403, %v2402
        %2412 = vrot.lane.b32.xlu0 %v756, 32
        %v2413 = vpop.permute.xlu0 %2412
        %2414 = vrot.lane.b32.xlu0 %v757, 32
        %v2415 = vpop.permute.xlu0 %2414
        %2416 = vrot.lane.b32.xlu0 %v758, 32
        %v2417 = vpop.permute.xlu0 %2416
        %2418 = vrot.lane.b32.xlu0 %v759, 32
        %v2419 = vpop.permute.xlu0 %2418
        %2420 = vrot.lane.b32.xlu0 %v760, 32
        %v2421 = vpop.permute.xlu0 %2420
        %2422 = vrot.lane.b32.xlu0 %v761, 32
        %v2423 = vpop.permute.xlu0 %2422
        %2424 = vrot.lane.b32.xlu0 %v762, 32
        %v2425 = vpop.permute.xlu0 %2424
        %2426 = vrot.lane.b32.xlu0 %v763, 32
        %v2427 = vpop.permute.xlu0 %2426
        %2436 = vmatprep.subr.bf16.mxu0 0
        %2437 = vmatpush1.bf16.msra.mxu0 %v2413
        %2438 = vmatprep.subr.bf16.mxu0 0
        %2439 = vmatpush1.bf16.msra.mxu0 %v2415
        %2440 = vmatprep.subr.bf16.mxu0 0
        %2441 = vmatpush1.bf16.msra.mxu0 %v2417
        %2442 = vmatprep.subr.bf16.mxu0 0
        %2443 = vmatpush1.bf16.msra.mxu0 %v2419
        %2444 = vmatprep.subr.bf16.mxu0 0
        %2445 = vmatpush1.bf16.msra.mxu0 %v2421
        %2446 = vmatprep.subr.bf16.mxu0 0
        %2447 = vmatpush1.bf16.msra.mxu0 %v2423
        %2448 = vmatprep.subr.bf16.mxu0 0
        %2449 = vmatpush1.bf16.msra.mxu0 %v2425
        %2450 = vmatprep.subr.bf16.mxu0 0
        %2451 = vmatpush1.bf16.msra.mxu0 %v2427
        %2452 = vmatprep.subr.bf16.mxu0 0
        %2453 = vmatpush1.bf16.msra.mxu0 0
        %2454 = vmatprep.subr.bf16.mxu0 0
        %2455 = vmatpush1.bf16.msra.mxu0 0
        %2456 = vmatprep.subr.bf16.mxu0 0
        %2457 = vmatpush1.bf16.msra.mxu0 0
        %2458 = vmatprep.subr.bf16.mxu0 0
        %2459 = vmatpush1.bf16.msra.mxu0 0
        %2460 = vmatprep.subr.bf16.mxu0 0
        %2461 = vmatpush1.bf16.msra.mxu0 0
        %2462 = vmatprep.subr.bf16.mxu0 0
        %2463 = vmatpush1.bf16.msra.mxu0 0
        %2464 = vmatprep.subr.bf16.mxu0 0
        %2465 = vmatpush1.bf16.msra.mxu0 0
        %2466 = vmatprep.subr.bf16.mxu0 0
        %2467 = vmatpush1.bf16.msra.mxu0 0
        %2468 = vmatprep.mubr.bf16.mxu0 0
        %2469 = vmatmul.mubr.bf16.gmra.mrb[0].mxu0 %v2404
        %v2470 = vpop.f32.mrb[0].mxu0
        %v2471 = vadd.f32 0.0, %v2470
        %v2472 = vpop.f32.mrb[0].mxu0
        %v2473 = vpop.f32.mrb[0].mxu0
        %v2474 = vadd.f32 0.0, %v2473
        %v2475 = vpop.f32.mrb[0].mxu0
        %2476 = vmatprep.mubr.bf16.mxu0 0
        %2477 = vmatmul.mubr.bf16.gmra.mrb[0].mxu0 %v2405
        %v2478 = vpop.f32.mrb[0].mxu0
        %v2479 = vadd.f32 0.0, %v2478
        %v2480 = vpop.f32.mrb[0].mxu0
        %v2481 = vpop.f32.mrb[0].mxu0
        %v2482 = vadd.f32 0.0, %v2481
        %v2483 = vpop.f32.mrb[0].mxu0
        %2484 = vmatprep.mubr.bf16.mxu0 0
        %2485 = vmatmul.mubr.bf16.gmra.mrb[0].mxu0 %v2406
        %v2486 = vpop.f32.mrb[0].mxu0
        %v2487 = vadd.f32 0.0, %v2486
        %v2488 = vpop.f32.mrb[0].mxu0
        %v2489 = vpop.f32.mrb[0].mxu0
        %v2490 = vadd.f32 0.0, %v2489
        %v2491 = vpop.f32.mrb[0].mxu0
        %2492 = vmatprep.mubr.bf16.mxu0 0
        %2493 = vmatmul.mubr.bf16.gmra.mrb[0].mxu0 %v2407
        %v2494 = vpop.f32.mrb[0].mxu0
        %v2495 = vadd.f32 0.0, %v2494
        %v2496 = vpop.f32.mrb[0].mxu0
        %v2497 = vpop.f32.mrb[0].mxu0
        %v2498 = vadd.f32 0.0, %v2497
        %v2499 = vpop.f32.mrb[0].mxu0
        %2500 = vmatprep.mubr.bf16.mxu0 0
        %2501 = vmatmul.mubr.bf16.gmra.mrb[0].mxu0 %v2408
        %v2502 = vpop.f32.mrb[0].mxu0
        %v2503 = vadd.f32 0.0, %v2502
        %v2504 = vpop.f32.mrb[0].mxu0
        %v2505 = vpop.f32.mrb[0].mxu0
        %v2506 = vadd.f32 0.0, %v2505
        %v2507 = vpop.f32.mrb[0].mxu0
        %2508 = vmatprep.mubr.bf16.mxu0 0
        %2509 = vmatmul.mubr.bf16.gmra.mrb[0].mxu0 %v2409
        %v2510 = vpop.f32.mrb[0].mxu0
        %v2511 = vadd.f32 0.0, %v2510
        %v2512 = vpop.f32.mrb[0].mxu0
        %v2513 = vpop.f32.mrb[0].mxu0
        %v2514 = vadd.f32 0.0, %v2513
        %v2515 = vpop.f32.mrb[0].mxu0
        %2516 = vmatprep.mubr.bf16.mxu0 0
        %2517 = vmatmul.mubr.bf16.gmra.mrb[0].mxu0 %v2410
        %v2518 = vpop.f32.mrb[0].mxu0
        %v2519 = vadd.f32 0.0, %v2518
        %v2520 = vpop.f32.mrb[0].mxu0
        %v2521 = vpop.f32.mrb[0].mxu0
        %v2522 = vadd.f32 0.0, %v2521
        %v2523 = vpop.f32.mrb[0].mxu0
        %2524 = vmatprep.mubr.bf16.mxu0 0
        %2525 = vmatmul.mubr.bf16.gmra.mrb[0].mxu0 %v2411
        %v2526 = vpop.f32.mrb[0].mxu0
        %v2527 = vadd.f32 0.0, %v2526
        %v2528 = vpop.f32.mrb[0].mxu0
        %v2529 = vpop.f32.mrb[0].mxu0
        %v2530 = vadd.f32 0.0, %v2529
        %v2531 = vpop.f32.mrb[0].mxu0
        %2532 = vdwg.mxu0
        %2549 = vrot.lane.b32.xlu0 %v1571, 32
        %v2550 = vpop.permute.xlu0 %2549
        %2551 = vrot.lane.b32.xlu0 %v1574, 32
        %v2552 = vpop.permute.xlu0 %2551
        %2553 = vrot.lane.b32.xlu0 %v1579, 32
        %v2554 = vpop.permute.xlu0 %2553
        %2555 = vrot.lane.b32.xlu0 %v1582, 32
        %v2556 = vpop.permute.xlu0 %2555
        %2557 = vrot.lane.b32.xlu0 %v1587, 32
        %v2558 = vpop.permute.xlu0 %2557
        %2559 = vrot.lane.b32.xlu0 %v1590, 32
        %v2560 = vpop.permute.xlu0 %2559
        %2561 = vrot.lane.b32.xlu0 %v1595, 32
        %v2562 = vpop.permute.xlu0 %2561
        %2563 = vrot.lane.b32.xlu0 %v1598, 32
        %v2564 = vpop.permute.xlu0 %2563
        %2565 = vrot.lane.b32.xlu0 %v1603, 32
        %v2566 = vpop.permute.xlu0 %2565
        %2567 = vrot.lane.b32.xlu0 %v1606, 32
        %v2568 = vpop.permute.xlu0 %2567
        %2569 = vrot.lane.b32.xlu0 %v1611, 32
        %v2570 = vpop.permute.xlu0 %2569
        %2571 = vrot.lane.b32.xlu0 %v1614, 32
        %v2572 = vpop.permute.xlu0 %2571
        %2573 = vrot.lane.b32.xlu0 %v1619, 32
        %v2574 = vpop.permute.xlu0 %2573
        %2575 = vrot.lane.b32.xlu0 %v1622, 32
        %v2576 = vpop.permute.xlu0 %2575
        %2577 = vrot.lane.b32.xlu0 %v1627, 32
        %v2578 = vpop.permute.xlu0 %2577
        %2579 = vrot.lane.b32.xlu0 %v1630, 32
        %v2580 = vpop.permute.xlu0 %2579
        %2613 = vrot.lane.b32.xlu0 %v2021, 64
        %v2614 = vpop.permute.xlu0 %2613
        %2615 = vrot.lane.b32.xlu0 %v2024, 64
        %v2616 = vpop.permute.xlu0 %2615
        %2617 = vrot.lane.b32.xlu0 %v2029, 64
        %v2618 = vpop.permute.xlu0 %2617
        %2619 = vrot.lane.b32.xlu0 %v2032, 64
        %v2620 = vpop.permute.xlu0 %2619
        %2621 = vrot.lane.b32.xlu0 %v2037, 64
        %v2622 = vpop.permute.xlu0 %2621
        %2623 = vrot.lane.b32.xlu0 %v2040, 64
        %v2624 = vpop.permute.xlu0 %2623
        %2625 = vrot.lane.b32.xlu0 %v2045, 64
        %v2626 = vpop.permute.xlu0 %2625
        %2627 = vrot.lane.b32.xlu0 %v2048, 64
        %v2628 = vpop.permute.xlu0 %2627
        %2629 = vrot.lane.b32.xlu0 %v2053, 64
        %v2630 = vpop.permute.xlu0 %2629
        %2631 = vrot.lane.b32.xlu0 %v2056, 64
        %v2632 = vpop.permute.xlu0 %2631
        %2633 = vrot.lane.b32.xlu0 %v2061, 64
        %v2634 = vpop.permute.xlu0 %2633
        %2635 = vrot.lane.b32.xlu0 %v2064, 64
        %v2636 = vpop.permute.xlu0 %2635
        %2637 = vrot.lane.b32.xlu0 %v2069, 64
        %v2638 = vpop.permute.xlu0 %2637
        %2639 = vrot.lane.b32.xlu0 %v2072, 64
        %v2640 = vpop.permute.xlu0 %2639
        %2641 = vrot.lane.b32.xlu0 %v2077, 64
        %v2642 = vpop.permute.xlu0 %2641
        %2643 = vrot.lane.b32.xlu0 %v2080, 64
        %v2644 = vpop.permute.xlu0 %2643
        %2677 = vrot.lane.b32.xlu0 %v2471, 96
        %v2678 = vpop.permute.xlu0 %2677
        %2679 = vrot.lane.b32.xlu0 %v2474, 96
        %v2680 = vpop.permute.xlu0 %2679
        %2681 = vrot.lane.b32.xlu0 %v2479, 96
        %v2682 = vpop.permute.xlu0 %2681
        %2683 = vrot.lane.b32.xlu0 %v2482, 96
        %v2684 = vpop.permute.xlu0 %2683
        %2685 = vrot.lane.b32.xlu0 %v2487, 96
        %v2686 = vpop.permute.xlu0 %2685
        %2687 = vrot.lane.b32.xlu0 %v2490, 96
        %v2688 = vpop.permute.xlu0 %2687
        %2689 = vrot.lane.b32.xlu0 %v2495, 96
        %v2690 = vpop.permute.xlu0 %2689
        %2691 = vrot.lane.b32.xlu0 %v2498, 96
        %v2692 = vpop.permute.xlu0 %2691
        %2693 = vrot.lane.b32.xlu0 %v2503, 96
        %v2694 = vpop.permute.xlu0 %2693
        %2695 = vrot.lane.b32.xlu0 %v2506, 96
        %v2696 = vpop.permute.xlu0 %2695
        %2697 = vrot.lane.b32.xlu0 %v2511, 96
        %v2698 = vpop.permute.xlu0 %2697
        %2699 = vrot.lane.b32.xlu0 %v2514, 96
        %v2700 = vpop.permute.xlu0 %2699
        %2701 = vrot.lane.b32.xlu0 %v2519, 96
        %v2702 = vpop.permute.xlu0 %2701
        %2703 = vrot.lane.b32.xlu0 %v2522, 96
        %v2704 = vpop.permute.xlu0 %2703
        %2705 = vrot.lane.b32.xlu0 %v2527, 96
        %v2706 = vpop.permute.xlu0 %2705
        %2707 = vrot.lane.b32.xlu0 %v2530, 96
        %v2708 = vpop.permute.xlu0 %2707
        %v2725 = vsel %vm764, %v1097, %v2550
        %v2726 = vsel %vm764, %v1100, %v2552
        %v2727 = vsel %vm764, %v1105, %v2554
        %v2728 = vsel %vm764, %v1108, %v2556
        %v2729 = vsel %vm764, %v1113, %v2558
        %v2730 = vsel %vm764, %v1116, %v2560
        %v2731 = vsel %vm764, %v1121, %v2562
        %v2732 = vsel %vm764, %v1124, %v2564
        %v2733 = vsel %vm764, %v1129, %v2566
        %v2734 = vsel %vm764, %v1132, %v2568
        %v2735 = vsel %vm764, %v1137, %v2570
        %v2736 = vsel %vm764, %v1140, %v2572
        %v2737 = vsel %vm764, %v1145, %v2574
        %v2738 = vsel %vm764, %v1148, %v2576
        %v2739 = vsel %vm764, %v1153, %v2578
        %v2740 = vsel %vm764, %v1156, %v2580
        %vm2741 = vcmask 523264
        %v2742 = vsel %vm2741, %v2725, %v2614
        %v2743 = vsel %vm2741, %v2726, %v2616
        %v2744 = vsel %vm2741, %v2727, %v2618
        %v2745 = vsel %vm2741, %v2728, %v2620
        %v2746 = vsel %vm2741, %v2729, %v2622
        %v2747 = vsel %vm2741, %v2730, %v2624
        %v2748 = vsel %vm2741, %v2731, %v2626
        %v2749 = vsel %vm2741, %v2732, %v2628
        %v2750 = vsel %vm2741, %v2733, %v2630
        %v2751 = vsel %vm2741, %v2734, %v2632
        %v2752 = vsel %vm2741, %v2735, %v2634
        %v2753 = vsel %vm2741, %v2736, %v2636
        %v2754 = vsel %vm2741, %v2737, %v2638
        %v2755 = vsel %vm2741, %v2738, %v2640
        %v2756 = vsel %vm2741, %v2739, %v2642
        %v2757 = vsel %vm2741, %v2740, %v2644
        %vm2758 = vcmask 785408
        %v2759 = vsel %vm2758, %v2742, %v2678
        %v2760 = vsel %vm2758, %v2743, %v2680
        %v2761 = vsel %vm2758, %v2744, %v2682
        %v2762 = vsel %vm2758, %v2745, %v2684
        %v2763 = vsel %vm2758, %v2746, %v2686
        %v2764 = vsel %vm2758, %v2747, %v2688
        %v2765 = vsel %vm2758, %v2748, %v2690
        %v2766 = vsel %vm2758, %v2749, %v2692
        %v2767 = vsel %vm2758, %v2750, %v2694
        %v2768 = vsel %vm2758, %v2751, %v2696
        %v2769 = vsel %vm2758, %v2752, %v2698
        %v2770 = vsel %vm2758, %v2753, %v2700
        %v2771 = vsel %vm2758, %v2754, %v2702
        %v2772 = vsel %vm2758, %v2755, %v2704
        %v2773 = vsel %vm2758, %v2756, %v2706
        %v2774 = vsel %vm2758, %v2757, %v2708
        %v2775 = vpack.c.bf16 %v2760, %v2759
        %v2776 = vpack.c.bf16 %v2762, %v2761
        %v2777 = vpack.c.bf16 %v2764, %v2763
        %v2778 = vpack.c.bf16 %v2766, %v2765
        %v2779 = vpack.c.bf16 %v2768, %v2767
        %v2780 = vpack.c.bf16 %v2770, %v2769
        %v2781 = vpack.c.bf16 %v2772, %v2771
        %v2782 = vpack.c.bf16 %v2774, %v2773
        %v2783 = vld [vmem:[#allocation7] sm:$0xf]
        %v2784 = vld [vmem:[#allocation7 + $0x4] sm:$0xf]
        %v2785 = vld [vmem:[#allocation7 + $0x8] sm:$0xf]
        %v2786 = vld [vmem:[#allocation7 + $0xc] sm:$0xf]
        %v2787 = vld [vmem:[#allocation7 + $0x10] sm:$0xf]
        %v2788 = vld [vmem:[#allocation7 + $0x14] sm:$0xf]
        %v2789 = vld [vmem:[#allocation7 + $0x18] sm:$0xf]
        %v2790 = vld [vmem:[#allocation7 + $0x1c] sm:$0xf]
        %v2791 = vld [vmem:[#allocation7 + $0x20] sm:$0xf]
        %v2792 = vld [vmem:[#allocation7 + $0x24] sm:$0xf]
        %v2793 = vld [vmem:[#allocation7 + $0x28] sm:$0xf]
        %v2794 = vld [vmem:[#allocation7 + $0x2c] sm:$0xf]
        %v2795 = vld [vmem:[#allocation7 + $0x30] sm:$0xf]
        %v2796 = vld [vmem:[#allocation7 + $0x34] sm:$0xf]
        %v2797 = vld [vmem:[#allocation7 + $0x38] sm:$0xf]
        %v2798 = vld [vmem:[#allocation7 + $0x3c] sm:$0xf]
        %v2799 = vld [vmem:[%s4] sm:$0x1]
        %v2801 = vlaneseq
        %v2802 = vshrl.u32 %v2801, 7
        %v2803 = vsub.s32 0, %v2802
        %v2804 = vrot.slane %v2799, %v2803
        %v2822 = vunpack.c.l.b16 %v2783
        %v2823 = vunpack.c.l.b16 %v2784
        %v2824 = vunpack.c.l.b16 %v2785
        %v2825 = vunpack.c.l.b16 %v2786
        %v2826 = vunpack.c.l.b16 %v2787
        %v2827 = vunpack.c.l.b16 %v2788
        %v2828 = vunpack.c.l.b16 %v2789
        %v2829 = vunpack.c.l.b16 %v2790
        %v2830 = vunpack.c.l.b16 %v2791
        %v2831 = vunpack.c.l.b16 %v2792
        %v2832 = vunpack.c.l.b16 %v2793
        %v2833 = vunpack.c.l.b16 %v2794
        %v2834 = vunpack.c.l.b16 %v2795
        %v2835 = vunpack.c.l.b16 %v2796
        %v2836 = vunpack.c.l.b16 %v2797
        %v2837 = vunpack.c.l.b16 %v2798
        %v2838 = vpack.c.b16 %v2823, %v2822
        %v2839 = vpack.c.b16 %v2825, %v2824
        %v2840 = vpack.c.b16 %v2827, %v2826
        %v2841 = vpack.c.b16 %v2829, %v2828
        %v2842 = vpack.c.b16 %v2831, %v2830
        %v2843 = vpack.c.b16 %v2833, %v2832
        %v2844 = vpack.c.b16 %v2835, %v2834
        %v2845 = vpack.c.b16 %v2837, %v2836
        %2854 = vmatprep.subr.bf16.mxu0 0
        %2855 = vmatpush1.bf16.msra.mxu0 %v2838
        %2856 = vmatprep.subr.bf16.mxu0 0
        %2857 = vmatpush1.bf16.msra.mxu0 %v2839
        %2858 = vmatprep.subr.bf16.mxu0 0
        %2859 = vmatpush1.bf16.msra.mxu0 %v2840
        %2860 = vmatprep.subr.bf16.mxu0 0
        %2861 = vmatpush1.bf16.msra.mxu0 %v2841
        %2862 = vmatprep.subr.bf16.mxu0 0
        %2863 = vmatpush1.bf16.msra.mxu0 %v2842
        %2864 = vmatprep.subr.bf16.mxu0 0
        %2865 = vmatpush1.bf16.msra.mxu0 %v2843
        %2866 = vmatprep.subr.bf16.mxu0 0
        %2867 = vmatpush1.bf16.msra.mxu0 %v2844
        %2868 = vmatprep.subr.bf16.mxu0 0
        %2869 = vmatpush1.bf16.msra.mxu0 %v2845
        %2870 = vmatprep.subr.bf16.mxu0 0
        %2871 = vmatpush1.bf16.msra.mxu0 0
        %2872 = vmatprep.subr.bf16.mxu0 0
        %2873 = vmatpush1.bf16.msra.mxu0 0
        %2874 = vmatprep.subr.bf16.mxu0 0
        %2875 = vmatpush1.bf16.msra.mxu0 0
        %2876 = vmatprep.subr.bf16.mxu0 0
        %2877 = vmatpush1.bf16.msra.mxu0 0
        %2878 = vmatprep.subr.bf16.mxu0 0
        %2879 = vmatpush1.bf16.msra.mxu0 0
        %2880 = vmatprep.subr.bf16.mxu0 0
        %2881 = vmatpush1.bf16.msra.mxu0 0
        %2882 = vmatprep.subr.bf16.mxu0 0
        %2883 = vmatpush1.bf16.msra.mxu0 0
        %2884 = vmatprep.subr.bf16.mxu0 0
        %2885 = vmatpush1.bf16.msra.mxu0 0
        %2886 = vmatprep.mubr.bf16.mxu0 0
        %2887 = vmatmul.mubr.bf16.gmra.mrb[0].mxu0 %v2775
        %v2888 = vpop.f32.mrb[0].mxu0
        %v2889 = vadd.f32 %v2804, %v2888
        %v2890 = vpop.f32.mrb[0].mxu0
        %v2891 = vpop.f32.mrb[0].mxu0
        %v2892 = vadd.f32 %v2804, %v2891
        %v2893 = vpop.f32.mrb[0].mxu0
        %2894 = vmatprep.mubr.bf16.mxu0 0
        %2895 = vmatmul.mubr.bf16.gmra.mrb[0].mxu0 %v2776
        %v2896 = vpop.f32.mrb[0].mxu0
        %v2897 = vadd.f32 %v2804, %v2896
        %v2898 = vpop.f32.mrb[0].mxu0
        %v2899 = vpop.f32.mrb[0].mxu0
        %v2900 = vadd.f32 %v2804, %v2899
        %v2901 = vpop.f32.mrb[0].mxu0
        %2902 = vmatprep.mubr.bf16.mxu0 0
        %2903 = vmatmul.mubr.bf16.gmra.mrb[0].mxu0 %v2777
        %v2904 = vpop.f32.mrb[0].mxu0
        %v2905 = vadd.f32 %v2804, %v2904
        %v2906 = vpop.f32.mrb[0].mxu0
        %v2907 = vpop.f32.mrb[0].mxu0
        %v2908 = vadd.f32 %v2804, %v2907
        %v2909 = vpop.f32.mrb[0].mxu0
        %2910 = vmatprep.mubr.bf16.mxu0 0
        %2911 = vmatmul.mubr.bf16.gmra.mrb[0].mxu0 %v2778
        %v2912 = vpop.f32.mrb[0].mxu0
        %v2913 = vadd.f32 %v2804, %v2912
        %v2914 = vpop.f32.mrb[0].mxu0
        %v2915 = vpop.f32.mrb[0].mxu0
        %v2916 = vadd.f32 %v2804, %v2915
        %v2917 = vpop.f32.mrb[0].mxu0
        %2918 = vmatprep.mubr.bf16.mxu0 0
        %2919 = vmatmul.mubr.bf16.gmra.mrb[0].mxu0 %v2779
        %v2920 = vpop.f32.mrb[0].mxu0
        %v2921 = vadd.f32 %v2804, %v2920
        %v2922 = vpop.f32.mrb[0].mxu0
        %v2923 = vpop.f32.mrb[0].mxu0
        %v2924 = vadd.f32 %v2804, %v2923
        %v2925 = vpop.f32.mrb[0].mxu0
        %2926 = vmatprep.mubr.bf16.mxu0 0
        %2927 = vmatmul.mubr.bf16.gmra.mrb[0].mxu0 %v2780
        %v2928 = vpop.f32.mrb[0].mxu0
        %v2929 = vadd.f32 %v2804, %v2928
        %v2930 = vpop.f32.mrb[0].mxu0
        %v2931 = vpop.f32.mrb[0].mxu0
        %v2932 = vadd.f32 %v2804, %v2931
        %v2933 = vpop.f32.mrb[0].mxu0
        %2934 = vmatprep.mubr.bf16.mxu0 0
        %2935 = vmatmul.mubr.bf16.gmra.mrb[0].mxu0 %v2781
        %v2936 = vpop.f32.mrb[0].mxu0
        %v2937 = vadd.f32 %v2804, %v2936
        %v2938 = vpop.f32.mrb[0].mxu0
        %v2939 = vpop.f32.mrb[0].mxu0
        %v2940 = vadd.f32 %v2804, %v2939
        %v2941 = vpop.f32.mrb[0].mxu0
        %2942 = vmatprep.mubr.bf16.mxu0 0
        %2943 = vmatmul.mubr.bf16.gmra.mrb[0].mxu0 %v2782
        %v2944 = vpop.f32.mrb[0].mxu0
        %v2945 = vadd.f32 %v2804, %v2944
        %v2946 = vpop.f32.mrb[0].mxu0
        %v2947 = vpop.f32.mrb[0].mxu0
        %v2948 = vadd.f32 %v2804, %v2947
        %v2949 = vpop.f32.mrb[0].mxu0
        %2950 = vdwg.mxu0
        %2951 = vst [vmem:[%s271] sm:$0xff] %v2889
        %2952 = vst [vmem:[%s271 + $0x8] sm:$0xff] %v2892
        %2953 = vst [vmem:[%s271 + $0x10] sm:$0xff] %v2897
        %2954 = vst [vmem:[%s271 + $0x18] sm:$0xff] %v2900
        %2955 = vst [vmem:[%s271 + $0x20] sm:$0xff] %v2905
        %2956 = vst [vmem:[%s271 + $0x28] sm:$0xff] %v2908
        %2957 = vst [vmem:[%s271 + $0x30] sm:$0xff] %v2913
        %2958 = vst [vmem:[%s271 + $0x38] sm:$0xff] %v2916
        %2959 = vst [vmem:[%s271 + $0x40] sm:$0xff] %v2921
        %2960 = vst [vmem:[%s271 + $0x48] sm:$0xff] %v2924
        %2961 = vst [vmem:[%s271 + $0x50] sm:$0xff] %v2929
        %2962 = vst [vmem:[%s271 + $0x58] sm:$0xff] %v2932
        %2963 = vst [vmem:[%s271 + $0x60] sm:$0xff] %v2937
        %2964 = vst [vmem:[%s271 + $0x68] sm:$0xff] %v2940
        %2965 = vst [vmem:[%s271 + $0x70] sm:$0xff] %v2945
        %2966 = vst [vmem:[%s271 + $0x78] sm:$0xff] %v2948
        %s2967 = sand.u32 %s141, 1
        %s2968 = scalar_lea.sflag [#allocation4], %s2967
        %s2969 = sand.u32 %s141, 1
        %s2970 = smul.addr %s2969, 128
        %s2971 = scalar_lea.vmem [#allocation8], %s2970
        // Predicated region
        $region53: #{tpu_custom_call.1} parent=39 // pred_check
          %p2972 = pneg %p151
        $region54: #{tpu_custom_call.1} parent=39 // pred_check_branch
          %2974 = sbr.rel (%p2972) target = $region56
        $region55: #{tpu_custom_call.1} parent=39 // pred_region
          %s2976 = ssub.s32 2048, 2048
          %2977 = vsyncadd %s2968, %s2976
          %s2978 = smul.addr %s23, 16
          %s2979 = smul.addr %s2978, 128
          %s2980 = scalar_lea.hbm %s5, %s2979
          %s2981 = sshll.u32 %s2971, 4
          %s2982 = int_to_ptr.vmem [resolvable:$true] %s2981
          %2987 = dma.vmem_to_hbm [thread:$0]  %s2982, 2048, %s2980, %s2968, 128, 128, 8
        $region56: #{tpu_custom_call.1} parent=39 // pred_fallthru
          _
      $region40: #{tpu_custom_call.1} parent=5 // pred_fallthru
        _
      %p2988 = scmp.le.s32.totalorder 2, %s18
      // Predicated region
      $region57: #{tpu_custom_call.1} parent=5 // pred_check
        %p2989 = pneg %p2988
      $region58: #{tpu_custom_call.1} parent=5 // pred_check_branch
        %2991 = sbr.rel (%p2989) target = $region60
      $region59: #{tpu_custom_call.1} parent=5 // pred_region
        %s2992 = ssub.s32 %s18, 2
        // Predicated region
        $region61: #{tpu_custom_call.1} parent=59 // pred_check
          %p2993 = pneg %p157
        $region62: #{tpu_custom_call.1} parent=59 // pred_check_branch
          %2995 = sbr.rel (%p2993) target = $region64
        $region63: #{tpu_custom_call.1} parent=59 // pred_region
          %s2996 = sand.u32 %s142, 1
          %s2997 = scalar_lea.sflag [#allocation4], %s2996
          %s2998 = sand.u32 %s142, 1
          %s2999 = smul.addr %s2998, 128
          %s3000 = scalar_lea.vmem [#allocation8], %s2999
          %3001 = dma.done %s2997, 2048
        $region64: #{tpu_custom_call.1} parent=59 // pred_fallthru
          _
      $region60: #{tpu_custom_call.1} parent=5 // pred_fallthru
        _
    $region6: #{tpu_custom_call.1} parent=1 // loop_footer
      %s22 = sadd.s32 1, %s18
    $region7: #{tpu_custom_call.1} parent=1 // loop_footer_branch
      %17 = sbr.rel target = $region3
    $region8: #{tpu_custom_call.1} parent=1 // loop_exit
      _
    %3002 = vsyncpa [#allocation3], 1
    %s3003 = scalar_lea.sflag [#allocation3], 1
    %3004 = vsyncpa %s3003, 1
    %3005 = vsyncpa [#allocation6], 1
    %3006 = vsyncpa [#allocation4], 1
    %s3007 = scalar_lea.sflag [#allocation4], 1
    %3008 = vsyncpa %s3007, 1

</llo_original>
